<compile_context>
chip_gen: v6e
topology: v6e:2x2x1
jax: 0.10.0
libtpu: 0.0.40
codegen_flags: <defaults>
</compile_context>

<pallas_src>
import functools

import jax
import jax.numpy as jnp
from jax.experimental import pallas as pl
from jax.experimental.pallas import tpu as pltpu


def _round_up(x, m):
    return (x + m - 1) // m * m


def _pick_batch_tile(B, l_conv):
    """Batch elements per grid step: target M = bb*l_conv ~ 256 MXU rows but
    keep >= 2 grid steps when B allows it (v7x shards the parallel axis
    across its 2 TensorCores)."""
    target = max(1, 256 // max(1, l_conv))
    cap = B if B < 2 else max(1, B // 2)
    cap = min(cap, target)
    for d in range(cap, 0, -1):
        if B % d == 0:
            return d
    return 1


# ---------------------------------------------------------------------------
# Fused kernel: all CNN blocks + final Linear, one grid step = one batch chunk
# ---------------------------------------------------------------------------
def _fused_cnn_kernel(*refs, layers, window, pad, out_width):
    # ref layout: x, (w, shift) per block, lin_w, lin_b, out, (xs, ps) per block
    nb = len(layers)
    x_ref = refs[0]
    w_refs = [refs[1 + 2 * i] for i in range(nb)]
    sh_refs = [refs[2 + 2 * i] for i in range(nb)]
    lw_ref = refs[1 + 2 * nb]
    lb_ref = refs[2 + 2 * nb]
    out_ref = refs[3 + 2 * nb]
    xs_refs = [refs[4 + 2 * nb + 2 * i] for i in range(nb)]
    ps_refs = [refs[5 + 2 * nb + 2 * i] for i in range(nb)]

    bb = x_ref.shape[0]
    h = x_ref[...]                                     # (bb, L0, C_in0) bf16

    for i, (L_in, C_in, L_conv, Lc8, L_pool, C_out) in enumerate(layers):
        xs, ps = xs_refs[i], ps_refs[i]
        L_buf = xs.shape[1]                            # Lc8 + window - 1

        # Stage the zero-padded input (bf16, in VMEM).  Pad rows are written
        # every step on purpose (megacore-safe; see header).
        xs[:, :pad, :] = jnp.zeros((bb, pad, C_in), jnp.bfloat16)
        xs[:, pad + L_in:, :] = jnp.zeros((bb, L_buf - pad - L_in, C_in),
                                          jnp.bfloat16)
        xs[:, pad:pad + L_in, :] = h

        # im2col for the whole batch chunk (tap-major then C_in, matching the
        # wrapper's weight reshape) and ONE MXU matmul per grid step.
        xcol = jnp.concatenate(
            [xs[:, k:k + Lc8, :] for k in range(window)], axis=-1)
        acc = jnp.dot(xcol.reshape(bb * Lc8, window * C_in), w_refs[i][...],
                      preferred_element_type=jnp.float32)
        acc = acc.reshape(bb, Lc8, C_out)[:, :L_conv, :]   # drop align rows

        # MaxPool1d(k=2, s=2, p=1) on the raw accumulator (pool commutes with
        # the per-channel BN shift + monotone ReLU; every window has >= 1
        # real element, so the -inf padding never leaks).
        neg = jnp.full((bb, 1, C_out), -jnp.inf, jnp.float32)
        ps[:, 0:1, :] = neg                                # left -inf pad
        ps[:, 1:1 + L_conv, :] = acc
        if 2 * L_pool > 1 + L_conv:                        # static: L_conv even
            ps[:, 1 + L_conv:, :] = neg                    # right -inf pad
        pooled = jnp.maximum(ps[:, pl.ds(0, L_pool, stride=2), :],
                             ps[:, pl.ds(1, L_pool, stride=2), :])

        # Folded BN shift + ReLU (f32), next layer consumes bf16.
        h = jnp.maximum(pooled + sh_refs[i][...], 0.0).astype(jnp.bfloat16)

    # Final Linear (Dropout p=0.0 is identity at inference), fused so the only
    # HBM output is lane-dense (out padded to 128) and no extra launch exists.
    L_last = h.shape[1]
    acc_l = jnp.zeros((bb, out_width), jnp.float32)
    for l in range(L_last):
        acc_l = acc_l + jnp.dot(h[:, l, :], lw_ref[l],
                                preferred_element_type=jnp.float32)
    out_ref[:, 0, :] = acc_l + lb_ref[...]


# ---------------------------------------------------------------------------
# Parameter init (deterministic, synthetic) and forward wrapper
# ---------------------------------------------------------------------------
def init_params(key, input_dim, sequence_length, hidden_dims, out_dim):
    WINDOW = max(4, sequence_length // 2)
    PAD = WINDOW - 2
    f = lambda I: (I + PAD - 1) // 2 + 1
    params = {"blocks": [], "window": WINDOW, "pad": PAD}
    in_ch, L = input_dim, sequence_length
    for out_ch in hidden_dims:
        key, k1, k2, k3, k4, k5 = jax.random.split(key, 6)
        params["blocks"].append(dict(
            w=0.1 * jax.random.normal(k1, (out_ch, in_ch, WINDOW), jnp.float32),
            gamma=1.0 + 0.1 * jax.random.normal(k2, (out_ch,), jnp.float32),
            beta=0.1 * jax.random.normal(k3, (out_ch,), jnp.float32),
            mean=0.1 * jax.random.normal(k4, (out_ch,), jnp.float32),
            var=jnp.abs(jax.random.normal(k5, (out_ch,), jnp.float32)) + 0.5,
        ))
        in_ch, L = out_ch, f(L)
    params["represent_dim"] = L * hidden_dims[-1]
    key, k1, k2 = jax.random.split(key, 3)
    params["lin_w"] = 0.05 * jax.random.normal(
        k1, (out_dim, params["represent_dim"]), jnp.float32)
    params["lin_b"] = 0.01 * jax.random.normal(k2, (out_dim,), jnp.float32)
    return params


def cnn_forward(params, x_bsd):
    # x_bsd: (B, seq, input_dim) — same tensor the torch module receives
    # before its internal permute (we stay channels-last).
    eps = 1e-5
    window, pad = params["window"], params["pad"]
    B, L0, C0 = x_bsd.shape
    x = x_bsd.astype(jnp.bfloat16)

    # Fold BN into conv weights, pad channel widths to multiples of 128.
    layer_dims, flat_weights = [], []
    in_c_real, in_c, L = C0, C0, L0
    for blk in params["blocks"]:
        out_c = blk["w"].shape[0]
        out_c_p = _round_up(out_c, 128)
        scale = blk["gamma"] / jnp.sqrt(blk["var"] + eps)
        shift = blk["beta"] - blk["mean"] * scale
        w = jnp.transpose(blk["w"], (2, 1, 0)) * scale        # (W, C_in, C_out)
        w = jnp.pad(w, ((0, 0), (0, in_c - in_c_real), (0, out_c_p - out_c)))
        w_flat = w.reshape(window * in_c, out_c_p).astype(jnp.bfloat16)
        shift_p = jnp.pad(shift, (0, out_c_p - out_c)).reshape(
            1, out_c_p).astype(jnp.float32)

        l_conv = L + 2 * pad - window + 1
        lc8 = _round_up(l_conv, 8)
        l_pool = l_conv // 2 + 1
        layer_dims.append((L, in_c, l_conv, lc8, l_pool, out_c_p))
        flat_weights.extend([w_flat, shift_p])
        in_c_real, in_c, L = out_c, out_c_p, l_pool

    # Linear: torch flattens (C_last, L_last); reorder to (L, C, n) + pad.
    out_dim = params["lin_w"].shape[0]
    out_p = _round_up(out_dim, 128)
    L_last, C_last = L, in_c_real
    lw = params["lin_w"].reshape(out_dim, C_last, L_last)
    lw = jnp.transpose(lw, (2, 1, 0))                         # (L, C, out)
    lw = jnp.pad(lw, ((0, 0), (0, in_c - C_last),
                      (0, out_p - out_dim))).astype(jnp.bfloat16)
    lb = jnp.pad(params["lin_b"], (0, out_p - out_dim)).reshape(
        1, out_p).astype(jnp.float32)

    bb = _pick_batch_tile(B, layer_dims[0][2])

    in_specs = [pl.BlockSpec((bb, L0, C0), lambda i: (i, 0, 0))]
    for w_flat, shift_p in zip(flat_weights[0::2], flat_weights[1::2]):
        in_specs.append(pl.BlockSpec(w_flat.shape, lambda i: (0, 0)))
        in_specs.append(pl.BlockSpec(shift_p.shape, lambda i: (0, 0)))
    in_specs.append(pl.BlockSpec(lw.shape, lambda i: (0, 0, 0)))
    in_specs.append(pl.BlockSpec(lb.shape, lambda i: (0, 0)))

    scratch = []
    for (_, c_in, _, lc8, l_pool, c_out_p) in layer_dims:
        scratch.append(pltpu.VMEM((bb, lc8 + window - 1, c_in), jnp.bfloat16))
        scratch.append(pltpu.VMEM((bb, 2 * l_pool, c_out_p), jnp.float32))

    # VMEM budget from the actual footprint (double-buffered I/O + weights +
    # scratch) with headroom, capped conservatively for v7x's 64 MiB VMEM.
    w_bytes = sum(a.size * a.dtype.itemsize for a in flat_weights)
    w_bytes += lw.size * 2 + lb.size * 4
    io_bytes = bb * L0 * C0 * 2 + bb * out_p * 4
    sc_bytes = sum(bb * (lc8 + window - 1) * c_in * 2 +
                   bb * 2 * l_pool * c_out_p * 4
                   for (_, c_in, _, lc8, l_pool, c_out_p) in layer_dims)
    vmem_limit = int(min(48 * 2 ** 20,
                         max(16 * 2 ** 20,
                             2 * (2 * (w_bytes + io_bytes) + sc_bytes))))

    kernel = functools.partial(_fused_cnn_kernel, layers=tuple(layer_dims),
                               window=window, pad=pad, out_width=out_p)

    out = pl.pallas_call(
        kernel,
        out_shape=jax.ShapeDtypeStruct((B, 1, out_p), jnp.float32),
        grid_spec=pltpu.PrefetchScalarGridSpec(
            num_scalar_prefetch=0,
            grid=(B // bb,),
            in_specs=in_specs,
            out_specs=pl.BlockSpec((bb, 1, out_p), lambda i: (i, 0, 0)),
            scratch_shapes=scratch,
        ),
        compiler_params=pltpu.CompilerParams(
            dimension_semantics=("parallel",),
            vmem_limit_bytes=vmem_limit,
        ),
    )(x, *flat_weights, lw, lb)
    return out[:, 0, :out_dim]


# pure-JAX reference (same math incl. bf16 rounding points, no Pallas)
def cnn_reference(params, x_bsd):
    eps = 1e-5
    pad, W = params["pad"], params["window"]
    h = x_bsd.astype(jnp.bfloat16).astype(jnp.float32)     # (B, L, C)
    for blk in params["blocks"]:
        scale = blk["gamma"] / jnp.sqrt(blk["var"] + eps)
        shift = blk["beta"] - blk["mean"] * scale
        w = (jnp.transpose(blk["w"], (2, 1, 0)) * scale
             ).astype(jnp.bfloat16).astype(jnp.float32)
        xp = jnp.pad(h, ((0, 0), (pad, pad), (0, 0)))
        L_conv = xp.shape[1] - W + 1
        acc = jnp.zeros((h.shape[0], L_conv, w.shape[2]), jnp.float32)
        for k in range(W):
            acc = acc + jnp.einsum("blc,cd->bld", xp[:, k:k + L_conv, :], w[k],
                                   precision=jax.lax.Precision.HIGHEST)
        y = jnp.maximum(acc + shift, 0.0)
        L_pool = L_conv // 2 + 1
        pieces = [jnp.full((h.shape[0], 1, y.shape[2]), -jnp.inf), y]
        extra = 2 * L_pool - L_conv - 1
        if extra:
            pieces.append(jnp.full((h.shape[0], extra, y.shape[2]), -jnp.inf))
        yp = jnp.concatenate(pieces, axis=1)
        h = jnp.max(yp.reshape(h.shape[0], L_pool, 2, y.shape[2]), axis=2)
        h = h.astype(jnp.bfloat16).astype(jnp.float32)     # mirror bf16 hops
    flat = jnp.transpose(h, (0, 2, 1)).reshape(h.shape[0], -1)   # (C, L) order
    flat = flat.astype(jnp.bfloat16).astype(jnp.float32)
    lw = params["lin_w"].astype(jnp.bfloat16).astype(jnp.float32)
    return jnp.dot(flat, lw.T, precision=jax.lax.Precision.HIGHEST) + params["lin_b"]


if __name__ == "__main__":
    B, seq, input_dim, hidden, out_dim = 2, 16, 4, [32, 32], 2
    key = jax.random.PRNGKey(0)
    kx, kp = jax.random.split(key)
    x = jax.random.normal(kx, (B, seq, input_dim), jnp.float32)
    params = init_params(kp, input_dim, seq, hidden, out_dim)

    fwd = jax.jit(lambda xx: cnn_forward(params, xx))
    out = jax.block_until_ready(fwd(x))
    ref = cnn_reference(params, x)

    assert out.shape == (B, out_dim), out.shape
    assert jnp.allclose(out, ref, atol=1e-2, rtol=1e-2), (out, ref)
    print("KERNEL_OK")
</pallas_src>

<mosaic_0001>
module attributes {stable_mosaic.version = 11 : i64} {
  func.func @_fused_cnn_kernel(%arg0: i32, %arg1: memref<1x16x4xbf16, #tpu.memory_space<vmem>>, %arg2: memref<32x128xbf16, #tpu.memory_space<vmem>>, %arg3: memref<1x128xf32, #tpu.memory_space<vmem>>, %arg4: memref<1024x128xbf16, #tpu.memory_space<vmem>>, %arg5: memref<1x128xf32, #tpu.memory_space<vmem>>, %arg6: memref<9x128x128xbf16, #tpu.memory_space<vmem>>, %arg7: memref<1x128xf32, #tpu.memory_space<vmem>>, %arg8: memref<1x1x128xf32, #tpu.memory_space<vmem>>, %arg9: memref<1x31x4xbf16, #tpu.memory_space<vmem>>, %arg10: memref<1x22x128xf32, #tpu.memory_space<vmem>>, %arg11: memref<1x23x128xbf16, #tpu.memory_space<vmem>>, %arg12: memref<1x18x128xf32, #tpu.memory_space<vmem>>) attributes {dimension_semantics = [#tpu.dimension_semantics<parallel>], iteration_bounds = array<i64: 2>, scalar_prefetch = 0 : i64, scratch_operands = 4 : i64, tpu.core_type = #tpu.core_type<tc>, window_params = [{transform_indices = @transform_0, window_bounds = array<i64: 1, 16, 4>}, {pipeline_mode = #tpu.pipeline_mode<synchronous>, transform_indices = @transform_1, window_bounds = array<i64: 32, 128>}, {pipeline_mode = #tpu.pipeline_mode<synchronous>, transform_indices = @transform_2, window_bounds = array<i64: 1, 128>}, {pipeline_mode = #tpu.pipeline_mode<synchronous>, transform_indices = @transform_3, window_bounds = array<i64: 1024, 128>}, {pipeline_mode = #tpu.pipeline_mode<synchronous>, transform_indices = @transform_4, window_bounds = array<i64: 1, 128>}, {pipeline_mode = #tpu.pipeline_mode<synchronous>, transform_indices = @transform_5, window_bounds = array<i64: 9, 128, 128>}, {pipeline_mode = #tpu.pipeline_mode<synchronous>, transform_indices = @transform_6, window_bounds = array<i64: 1, 128>}, {transform_indices = @transform_7, window_bounds = array<i64: 1, 1, 128>}]} {
    %c0 = arith.constant 0 : index
    %c0_0 = arith.constant 0 : index
    %c0_1 = arith.constant 0 : index
    %0 = vector.load %arg1[%c0, %c0_0, %c0_1] : memref<1x16x4xbf16, #tpu.memory_space<vmem>>, vector<1x16x4xbf16>
    %cst = arith.constant 0.000000e+00 : bf16
    %1 = vector.broadcast %cst : bf16 to vector<1x6x4xbf16>
    %c0_2 = arith.constant 0 : index
    %c0_3 = arith.constant 0 : index
    %c0_4 = arith.constant 0 : index
    %2 = vector.load %arg9[%c0_2, %c0_3, %c0_4] : memref<1x31x4xbf16, #tpu.memory_space<vmem>>, vector<1x6x4xbf16>
    tpu.vector_store %arg9[%c0_2, %c0_3, %c0_4], %1 {strides = array<i32>} : memref<1x31x4xbf16, #tpu.memory_space<vmem>>, vector<1x6x4xbf16>,
    %cst_5 = arith.constant 0.000000e+00 : bf16
    %3 = vector.broadcast %cst_5 : bf16 to vector<1x9x4xbf16>
    %c0_6 = arith.constant 0 : index
    %c22 = arith.constant 22 : index
    %c0_7 = arith.constant 0 : index
    %4 = vector.load %arg9[%c0_6, %c22, %c0_7] : memref<1x31x4xbf16, #tpu.memory_space<vmem>>, vector<1x9x4xbf16>
    tpu.vector_store %arg9[%c0_6, %c22, %c0_7], %3 {strides = array<i32>} : memref<1x31x4xbf16, #tpu.memory_space<vmem>>, vector<1x9x4xbf16>,
    %c0_8 = arith.constant 0 : index
    %c6 = arith.constant 6 : index
    %c0_9 = arith.constant 0 : index
    %5 = vector.load %arg9[%c0_8, %c6, %c0_9] : memref<1x31x4xbf16, #tpu.memory_space<vmem>>, vector<1x16x4xbf16>
    tpu.vector_store %arg9[%c0_8, %c6, %c0_9], %0 {strides = array<i32>} : memref<1x31x4xbf16, #tpu.memory_space<vmem>>, vector<1x16x4xbf16>,
    %c0_10 = arith.constant 0 : index
    %c0_11 = arith.constant 0 : index
    %c0_12 = arith.constant 0 : index
    %6 = vector.load %arg9[%c0_10, %c0_11, %c0_12] : memref<1x31x4xbf16, #tpu.memory_space<vmem>>, vector<1x24x4xbf16>
    %c0_13 = arith.constant 0 : index
    %c1 = arith.constant 1 : index
    %c0_14 = arith.constant 0 : index
    %7 = vector.load %arg9[%c0_13, %c1, %c0_14] : memref<1x31x4xbf16, #tpu.memory_space<vmem>>, vector<1x24x4xbf16>
    %c0_15 = arith.constant 0 : index
    %c2 = arith.constant 2 : index
    %c0_16 = arith.constant 0 : index
    %8 = vector.load %arg9[%c0_15, %c2, %c0_16] : memref<1x31x4xbf16, #tpu.memory_space<vmem>>, vector<1x24x4xbf16>
    %c0_17 = arith.constant 0 : index
    %c3 = arith.constant 3 : index
    %c0_18 = arith.constant 0 : index
    %9 = vector.load %arg9[%c0_17, %c3, %c0_18] : memref<1x31x4xbf16, #tpu.memory_space<vmem>>, vector<1x24x4xbf16>
    %c0_19 = arith.constant 0 : index
    %c4 = arith.constant 4 : index
    %c0_20 = arith.constant 0 : index
    %10 = vector.load %arg9[%c0_19, %c4, %c0_20] : memref<1x31x4xbf16, #tpu.memory_space<vmem>>, vector<1x24x4xbf16>
    %c0_21 = arith.constant 0 : index
    %c5 = arith.constant 5 : index
    %c0_22 = arith.constant 0 : index
    %11 = vector.load %arg9[%c0_21, %c5, %c0_22] : memref<1x31x4xbf16, #tpu.memory_space<vmem>>, vector<1x24x4xbf16>
    %c0_23 = arith.constant 0 : index
    %c6_24 = arith.constant 6 : index
    %c0_25 = arith.constant 0 : index
    %12 = vector.load %arg9[%c0_23, %c6_24, %c0_25] : memref<1x31x4xbf16, #tpu.memory_space<vmem>>, vector<1x24x4xbf16>
    %c0_26 = arith.constant 0 : index
    %c7 = arith.constant 7 : index
    %c0_27 = arith.constant 0 : index
    %13 = vector.load %arg9[%c0_26, %c7, %c0_27] : memref<1x31x4xbf16, #tpu.memory_space<vmem>>, vector<1x24x4xbf16>
    %14 = tpu.concatenate %6, %7, %8, %9, %10, %11, %12, %13 in 2 : vector<1x24x4xbf16>, vector<1x24x4xbf16>, vector<1x24x4xbf16>, vector<1x24x4xbf16>, vector<1x24x4xbf16>, vector<1x24x4xbf16>, vector<1x24x4xbf16>, vector<1x24x4xbf16> -> vector<1x24x32xbf16>
    %15 = vector.shape_cast %14 : vector<1x24x32xbf16> to vector<24x32xbf16>
    %c0_28 = arith.constant 0 : index
    %c0_29 = arith.constant 0 : index
    %16 = vector.load %arg2[%c0_28, %c0_29] : memref<32x128xbf16, #tpu.memory_space<vmem>>, vector<32x128xbf16>
    %cst_30 = arith.constant dense<0.000000e+00> : vector<24x128xf32>
    %17 = tpu.matmul %15, %16, %cst_30 {dimension_numbers = #tpu.dot_dimension_numbers<[1], [0], [0], [1], [0, 0, 1, 1], [], []>} : vector<24x32xbf16>, vector<32x128xbf16>, vector<24x128xf32> -> vector<24x128xf32>
    %18 = vector.shape_cast %17 : vector<24x128xf32> to vector<1x24x128xf32>
    %19 = vector.extract_strided_slice %18 {offsets = [0, 0, 0], sizes = [1, 21, 128], strides = [1, 1, 1]} : vector<1x24x128xf32> to vector<1x21x128xf32>
    %cst_31 = arith.constant 0xFF800000 : f32
    %20 = vector.broadcast %cst_31 : f32 to vector<1x1x128xf32>
    %c0_32 = arith.constant 0 : index
    %c0_33 = arith.constant 0 : index
    %c0_34 = arith.constant 0 : index
    %21 = vector.load %arg10[%c0_32, %c0_33, %c0_34] : memref<1x22x128xf32, #tpu.memory_space<vmem>>, vector<1x1x128xf32>
    tpu.vector_store %arg10[%c0_32, %c0_33, %c0_34], %20 {strides = array<i32>} : memref<1x22x128xf32, #tpu.memory_space<vmem>>, vector<1x1x128xf32>,
    %c0_35 = arith.constant 0 : index
    %c1_36 = arith.constant 1 : index
    %c0_37 = arith.constant 0 : index
    %22 = vector.load %arg10[%c0_35, %c1_36, %c0_37] : memref<1x22x128xf32, #tpu.memory_space<vmem>>, vector<1x21x128xf32>
    tpu.vector_store %arg10[%c0_35, %c1_36, %c0_37], %19 {strides = array<i32>} : memref<1x22x128xf32, #tpu.memory_space<vmem>>, vector<1x21x128xf32>,
    %c0_38 = arith.constant 0 : index
    %c0_39 = arith.constant 0 : index
    %c0_40 = arith.constant 0 : index
    %23 = tpu.strided_load %arg10[%c0_38, %c0_39, %c0_40] {strides = array<i32: 1, 2, 1>} : memref<1x22x128xf32, #tpu.memory_space<vmem>>, vector<1x11x128xf32>
    %c0_41 = arith.constant 0 : index
    %c1_42 = arith.constant 1 : index
    %c0_43 = arith.constant 0 : index
    %24 = tpu.strided_load %arg10[%c0_41, %c1_42, %c0_43] {strides = array<i32: 1, 2, 1>} : memref<1x22x128xf32, #tpu.memory_space<vmem>>, vector<1x11x128xf32>
    %25 = arith.maximumf %23, %24 : vector<1x11x128xf32>
    %c0_44 = arith.constant 0 : index
    %c0_45 = arith.constant 0 : index
    %26 = vector.load %arg3[%c0_44, %c0_45] : memref<1x128xf32, #tpu.memory_space<vmem>>, vector<1x128xf32>
    %27 = vector.shape_cast %26 : vector<1x128xf32> to vector<1x1x128xf32>
    %28 = vector.broadcast %27 : vector<1x1x128xf32> to vector<1x11x128xf32>
    %29 = arith.addf %25, %28 : vector<1x11x128xf32>
    %cst_46 = arith.constant 0.000000e+00 : f32
    %30 = vector.broadcast %cst_46 : f32 to vector<1x11x128xf32>
    %31 = arith.maximumf %29, %30 : vector<1x11x128xf32>
    %32 = arith.truncf %31 : vector<1x11x128xf32> to vector<1x11x128xbf16>
    %cst_47 = arith.constant 0.000000e+00 : bf16
    %33 = vector.broadcast %cst_47 : bf16 to vector<1x6x128xbf16>
    %c0_48 = arith.constant 0 : index
    %c0_49 = arith.constant 0 : index
    %c0_50 = arith.constant 0 : index
    %34 = vector.load %arg11[%c0_48, %c0_49, %c0_50] : memref<1x23x128xbf16, #tpu.memory_space<vmem>>, vector<1x6x128xbf16>
    tpu.vector_store %arg11[%c0_48, %c0_49, %c0_50], %33 {strides = array<i32>} : memref<1x23x128xbf16, #tpu.memory_space<vmem>>, vector<1x6x128xbf16>,
    %cst_51 = arith.constant 0.000000e+00 : bf16
    %35 = vector.broadcast %cst_51 : bf16 to vector<1x6x128xbf16>
    %c0_52 = arith.constant 0 : index
    %c17 = arith.constant 17 : index
    %c0_53 = arith.constant 0 : index
    %36 = vector.load %arg11[%c0_52, %c17, %c0_53] : memref<1x23x128xbf16, #tpu.memory_space<vmem>>, vector<1x6x128xbf16>
    tpu.vector_store %arg11[%c0_52, %c17, %c0_53], %35 {strides = array<i32>} : memref<1x23x128xbf16, #tpu.memory_space<vmem>>, vector<1x6x128xbf16>,
    %c0_54 = arith.constant 0 : index
    %c6_55 = arith.constant 6 : index
    %c0_56 = arith.constant 0 : index
    %37 = vector.load %arg11[%c0_54, %c6_55, %c0_56] : memref<1x23x128xbf16, #tpu.memory_space<vmem>>, vector<1x11x128xbf16>
    tpu.vector_store %arg11[%c0_54, %c6_55, %c0_56], %32 {strides = array<i32>} : memref<1x23x128xbf16, #tpu.memory_space<vmem>>, vector<1x11x128xbf16>,
    %c0_57 = arith.constant 0 : index
    %c0_58 = arith.constant 0 : index
    %c0_59 = arith.constant 0 : index
    %38 = vector.load %arg11[%c0_57, %c0_58, %c0_59] : memref<1x23x128xbf16, #tpu.memory_space<vmem>>, vector<1x16x128xbf16>
    %c0_60 = arith.constant 0 : index
    %c1_61 = arith.constant 1 : index
    %c0_62 = arith.constant 0 : index
    %39 = vector.load %arg11[%c0_60, %c1_61, %c0_62] : memref<1x23x128xbf16, #tpu.memory_space<vmem>>, vector<1x16x128xbf16>
    %c0_63 = arith.constant 0 : index
    %c2_64 = arith.constant 2 : index
    %c0_65 = arith.constant 0 : index
    %40 = vector.load %arg11[%c0_63, %c2_64, %c0_65] : memref<1x23x128xbf16, #tpu.memory_space<vmem>>, vector<1x16x128xbf16>
    %c0_66 = arith.constant 0 : index
    %c3_67 = arith.constant 3 : index
    %c0_68 = arith.constant 0 : index
    %41 = vector.load %arg11[%c0_66, %c3_67, %c0_68] : memref<1x23x128xbf16, #tpu.memory_space<vmem>>, vector<1x16x128xbf16>
    %c0_69 = arith.constant 0 : index
    %c4_70 = arith.constant 4 : index
    %c0_71 = arith.constant 0 : index
    %42 = vector.load %arg11[%c0_69, %c4_70, %c0_71] : memref<1x23x128xbf16, #tpu.memory_space<vmem>>, vector<1x16x128xbf16>
    %c0_72 = arith.constant 0 : index
    %c5_73 = arith.constant 5 : index
    %c0_74 = arith.constant 0 : index
    %43 = vector.load %arg11[%c0_72, %c5_73, %c0_74] : memref<1x23x128xbf16, #tpu.memory_space<vmem>>, vector<1x16x128xbf16>
    %c0_75 = arith.constant 0 : index
    %c6_76 = arith.constant 6 : index
    %c0_77 = arith.constant 0 : index
    %44 = vector.load %arg11[%c0_75, %c6_76, %c0_77] : memref<1x23x128xbf16, #tpu.memory_space<vmem>>, vector<1x16x128xbf16>
    %c0_78 = arith.constant 0 : index
    %c7_79 = arith.constant 7 : index
    %c0_80 = arith.constant 0 : index
    %45 = vector.load %arg11[%c0_78, %c7_79, %c0_80] : memref<1x23x128xbf16, #tpu.memory_space<vmem>>, vector<1x16x128xbf16>
    %46 = tpu.concatenate %38, %39, %40, %41, %42, %43, %44, %45 in 2 : vector<1x16x128xbf16>, vector<1x16x128xbf16>, vector<1x16x128xbf16>, vector<1x16x128xbf16>, vector<1x16x128xbf16>, vector<1x16x128xbf16>, vector<1x16x128xbf16>, vector<1x16x128xbf16> -> vector<1x16x1024xbf16>
    %47 = vector.shape_cast %46 : vector<1x16x1024xbf16> to vector<16x1024xbf16>
    %c0_81 = arith.constant 0 : index
    %c0_82 = arith.constant 0 : index
    %48 = vector.load %arg4[%c0_81, %c0_82] : memref<1024x128xbf16, #tpu.memory_space<vmem>>, vector<1024x128xbf16>
    %cst_83 = arith.constant dense<0.000000e+00> : vector<16x128xf32>
    %49 = tpu.matmul %47, %48, %cst_83 {dimension_numbers = #tpu.dot_dimension_numbers<[1], [0], [0], [1], [0, 0, 1, 1], [], []>} : vector<16x1024xbf16>, vector<1024x128xbf16>, vector<16x128xf32> -> vector<16x128xf32>
    %50 = vector.shape_cast %49 : vector<16x128xf32> to vector<1x16x128xf32>
    %cst_84 = arith.constant 0xFF800000 : f32
    %51 = vector.broadcast %cst_84 : f32 to vector<1x1x128xf32>
    %c0_85 = arith.constant 0 : index
    %c0_86 = arith.constant 0 : index
    %c0_87 = arith.constant 0 : index
    %52 = vector.load %arg12[%c0_85, %c0_86, %c0_87] : memref<1x18x128xf32, #tpu.memory_space<vmem>>, vector<1x1x128xf32>
    tpu.vector_store %arg12[%c0_85, %c0_86, %c0_87], %51 {strides = array<i32>} : memref<1x18x128xf32, #tpu.memory_space<vmem>>, vector<1x1x128xf32>,
    %c0_88 = arith.constant 0 : index
    %c1_89 = arith.constant 1 : index
    %c0_90 = arith.constant 0 : index
    %53 = vector.load %arg12[%c0_88, %c1_89, %c0_90] : memref<1x18x128xf32, #tpu.memory_space<vmem>>, vector<1x16x128xf32>
    tpu.vector_store %arg12[%c0_88, %c1_89, %c0_90], %50 {strides = array<i32>} : memref<1x18x128xf32, #tpu.memory_space<vmem>>, vector<1x16x128xf32>,
    %c0_91 = arith.constant 0 : index
    %c17_92 = arith.constant 17 : index
    %c0_93 = arith.constant 0 : index
    %54 = vector.load %arg12[%c0_91, %c17_92, %c0_93] : memref<1x18x128xf32, #tpu.memory_space<vmem>>, vector<1x1x128xf32>
    tpu.vector_store %arg12[%c0_91, %c17_92, %c0_93], %51 {strides = array<i32>} : memref<1x18x128xf32, #tpu.memory_space<vmem>>, vector<1x1x128xf32>,
    %c0_94 = arith.constant 0 : index
    %c0_95 = arith.constant 0 : index
    %c0_96 = arith.constant 0 : index
    %55 = tpu.strided_load %arg12[%c0_94, %c0_95, %c0_96] {strides = array<i32: 1, 2, 1>} : memref<1x18x128xf32, #tpu.memory_space<vmem>>, vector<1x9x128xf32>
    %c0_97 = arith.constant 0 : index
    %c1_98 = arith.constant 1 : index
    %c0_99 = arith.constant 0 : index
    %56 = tpu.strided_load %arg12[%c0_97, %c1_98, %c0_99] {strides = array<i32: 1, 2, 1>} : memref<1x18x128xf32, #tpu.memory_space<vmem>>, vector<1x9x128xf32>
    %57 = arith.maximumf %55, %56 : vector<1x9x128xf32>
    %c0_100 = arith.constant 0 : index
    %c0_101 = arith.constant 0 : index
    %58 = vector.load %arg5[%c0_100, %c0_101] : memref<1x128xf32, #tpu.memory_space<vmem>>, vector<1x128xf32>
    %59 = vector.shape_cast %58 : vector<1x128xf32> to vector<1x1x128xf32>
    %60 = vector.broadcast %59 : vector<1x1x128xf32> to vector<1x9x128xf32>
    %61 = arith.addf %57, %60 : vector<1x9x128xf32>
    %cst_102 = arith.constant 0.000000e+00 : f32
    %62 = vector.broadcast %cst_102 : f32 to vector<1x9x128xf32>
    %63 = arith.maximumf %61, %62 : vector<1x9x128xf32>
    %64 = arith.truncf %63 : vector<1x9x128xf32> to vector<1x9x128xbf16>
    %cst_103 = arith.constant 0.000000e+00 : f32
    %65 = vector.broadcast %cst_103 : f32 to vector<1x128xf32>
    %66 = vector.extract_strided_slice %64 {offsets = [0, 0, 0], sizes = [1, 1, 128], strides = [1, 1, 1]} : vector<1x9x128xbf16> to vector<1x1x128xbf16>
    %67 = vector.shape_cast %66 : vector<1x1x128xbf16> to vector<1x128xbf16>
    %c0_104 = arith.constant 0 : index
    %c0_105 = arith.constant 0 : index
    %c0_106 = arith.constant 0 : index
    %68 = vector.load %arg6[%c0_104, %c0_105, %c0_106] : memref<9x128x128xbf16, #tpu.memory_space<vmem>>, vector<1x128x128xbf16>
    %69 = vector.shape_cast %68 : vector<1x128x128xbf16> to vector<128x128xbf16>
    %cst_107 = arith.constant dense<0.000000e+00> : vector<1x128xf32>
    %70 = tpu.matmul %67, %69, %cst_107 {dimension_numbers = #tpu.dot_dimension_numbers<[1], [0], [0], [1], [0, 0, 1, 1], [], []>} : vector<1x128xbf16>, vector<128x128xbf16>, vector<1x128xf32> -> vector<1x128xf32>
    %71 = arith.addf %65, %70 : vector<1x128xf32>
    %72 = vector.extract_strided_slice %64 {offsets = [0, 1, 0], sizes = [1, 1, 128], strides = [1, 1, 1]} : vector<1x9x128xbf16> to vector<1x1x128xbf16>
    %73 = vector.shape_cast %72 : vector<1x1x128xbf16> to vector<1x128xbf16>
    %c1_108 = arith.constant 1 : index
    %c0_109 = arith.constant 0 : index
    %c0_110 = arith.constant 0 : index
    %74 = vector.load %arg6[%c1_108, %c0_109, %c0_110] : memref<9x128x128xbf16, #tpu.memory_space<vmem>>, vector<1x128x128xbf16>
    %75 = vector.shape_cast %74 : vector<1x128x128xbf16> to vector<128x128xbf16>
    %cst_111 = arith.constant dense<0.000000e+00> : vector<1x128xf32>
    %76 = tpu.matmul %73, %75, %cst_111 {dimension_numbers = #tpu.dot_dimension_numbers<[1], [0], [0], [1], [0, 0, 1, 1], [], []>} : vector<1x128xbf16>, vector<128x128xbf16>, vector<1x128xf32> -> vector<1x128xf32>
    %77 = arith.addf %71, %76 : vector<1x128xf32>
    %78 = vector.extract_strided_slice %64 {offsets = [0, 2, 0], sizes = [1, 1, 128], strides = [1, 1, 1]} : vector<1x9x128xbf16> to vector<1x1x128xbf16>
    %79 = vector.shape_cast %78 : vector<1x1x128xbf16> to vector<1x128xbf16>
    %c2_112 = arith.constant 2 : index
    %c0_113 = arith.constant 0 : index
    %c0_114 = arith.constant 0 : index
    %80 = vector.load %arg6[%c2_112, %c0_113, %c0_114] : memref<9x128x128xbf16, #tpu.memory_space<vmem>>, vector<1x128x128xbf16>
    %81 = vector.shape_cast %80 : vector<1x128x128xbf16> to vector<128x128xbf16>
    %cst_115 = arith.constant dense<0.000000e+00> : vector<1x128xf32>
    %82 = tpu.matmul %79, %81, %cst_115 {dimension_numbers = #tpu.dot_dimension_numbers<[1], [0], [0], [1], [0, 0, 1, 1], [], []>} : vector<1x128xbf16>, vector<128x128xbf16>, vector<1x128xf32> -> vector<1x128xf32>
    %83 = arith.addf %77, %82 : vector<1x128xf32>
    %84 = vector.extract_strided_slice %64 {offsets = [0, 3, 0], sizes = [1, 1, 128], strides = [1, 1, 1]} : vector<1x9x128xbf16> to vector<1x1x128xbf16>
    %85 = vector.shape_cast %84 : vector<1x1x128xbf16> to vector<1x128xbf16>
    %c3_116 = arith.constant 3 : index
    %c0_117 = arith.constant 0 : index
    %c0_118 = arith.constant 0 : index
    %86 = vector.load %arg6[%c3_116, %c0_117, %c0_118] : memref<9x128x128xbf16, #tpu.memory_space<vmem>>, vector<1x128x128xbf16>
    %87 = vector.shape_cast %86 : vector<1x128x128xbf16> to vector<128x128xbf16>
    %cst_119 = arith.constant dense<0.000000e+00> : vector<1x128xf32>
    %88 = tpu.matmul %85, %87, %cst_119 {dimension_numbers = #tpu.dot_dimension_numbers<[1], [0], [0], [1], [0, 0, 1, 1], [], []>} : vector<1x128xbf16>, vector<128x128xbf16>, vector<1x128xf32> -> vector<1x128xf32>
    %89 = arith.addf %83, %88 : vector<1x128xf32>
    %90 = vector.extract_strided_slice %64 {offsets = [0, 4, 0], sizes = [1, 1, 128], strides = [1, 1, 1]} : vector<1x9x128xbf16> to vector<1x1x128xbf16>
    %91 = vector.shape_cast %90 : vector<1x1x128xbf16> to vector<1x128xbf16>
    %c4_120 = arith.constant 4 : index
    %c0_121 = arith.constant 0 : index
    %c0_122 = arith.constant 0 : index
    %92 = vector.load %arg6[%c4_120, %c0_121, %c0_122] : memref<9x128x128xbf16, #tpu.memory_space<vmem>>, vector<1x128x128xbf16>
    %93 = vector.shape_cast %92 : vector<1x128x128xbf16> to vector<128x128xbf16>
    %cst_123 = arith.constant dense<0.000000e+00> : vector<1x128xf32>
    %94 = tpu.matmul %91, %93, %cst_123 {dimension_numbers = #tpu.dot_dimension_numbers<[1], [0], [0], [1], [0, 0, 1, 1], [], []>} : vector<1x128xbf16>, vector<128x128xbf16>, vector<1x128xf32> -> vector<1x128xf32>
    %95 = arith.addf %89, %94 : vector<1x128xf32>
    %96 = vector.extract_strided_slice %64 {offsets = [0, 5, 0], sizes = [1, 1, 128], strides = [1, 1, 1]} : vector<1x9x128xbf16> to vector<1x1x128xbf16>
    %97 = vector.shape_cast %96 : vector<1x1x128xbf16> to vector<1x128xbf16>
    %c5_124 = arith.constant 5 : index
    %c0_125 = arith.constant 0 : index
    %c0_126 = arith.constant 0 : index
    %98 = vector.load %arg6[%c5_124, %c0_125, %c0_126] : memref<9x128x128xbf16, #tpu.memory_space<vmem>>, vector<1x128x128xbf16>
    %99 = vector.shape_cast %98 : vector<1x128x128xbf16> to vector<128x128xbf16>
    %cst_127 = arith.constant dense<0.000000e+00> : vector<1x128xf32>
    %100 = tpu.matmul %97, %99, %cst_127 {dimension_numbers = #tpu.dot_dimension_numbers<[1], [0], [0], [1], [0, 0, 1, 1], [], []>} : vector<1x128xbf16>, vector<128x128xbf16>, vector<1x128xf32> -> vector<1x128xf32>
    %101 = arith.addf %95, %100 : vector<1x128xf32>
    %102 = vector.extract_strided_slice %64 {offsets = [0, 6, 0], sizes = [1, 1, 128], strides = [1, 1, 1]} : vector<1x9x128xbf16> to vector<1x1x128xbf16>
    %103 = vector.shape_cast %102 : vector<1x1x128xbf16> to vector<1x128xbf16>
    %c6_128 = arith.constant 6 : index
    %c0_129 = arith.constant 0 : index
    %c0_130 = arith.constant 0 : index
    %104 = vector.load %arg6[%c6_128, %c0_129, %c0_130] : memref<9x128x128xbf16, #tpu.memory_space<vmem>>, vector<1x128x128xbf16>
    %105 = vector.shape_cast %104 : vector<1x128x128xbf16> to vector<128x128xbf16>
    %cst_131 = arith.constant dense<0.000000e+00> : vector<1x128xf32>
    %106 = tpu.matmul %103, %105, %cst_131 {dimension_numbers = #tpu.dot_dimension_numbers<[1], [0], [0], [1], [0, 0, 1, 1], [], []>} : vector<1x128xbf16>, vector<128x128xbf16>, vector<1x128xf32> -> vector<1x128xf32>
    %107 = arith.addf %101, %106 : vector<1x128xf32>
    %108 = vector.extract_strided_slice %64 {offsets = [0, 7, 0], sizes = [1, 1, 128], strides = [1, 1, 1]} : vector<1x9x128xbf16> to vector<1x1x128xbf16>
    %109 = vector.shape_cast %108 : vector<1x1x128xbf16> to vector<1x128xbf16>
    %c7_132 = arith.constant 7 : index
    %c0_133 = arith.constant 0 : index
    %c0_134 = arith.constant 0 : index
    %110 = vector.load %arg6[%c7_132, %c0_133, %c0_134] : memref<9x128x128xbf16, #tpu.memory_space<vmem>>, vector<1x128x128xbf16>
    %111 = vector.shape_cast %110 : vector<1x128x128xbf16> to vector<128x128xbf16>
    %cst_135 = arith.constant dense<0.000000e+00> : vector<1x128xf32>
    %112 = tpu.matmul %109, %111, %cst_135 {dimension_numbers = #tpu.dot_dimension_numbers<[1], [0], [0], [1], [0, 0, 1, 1], [], []>} : vector<1x128xbf16>, vector<128x128xbf16>, vector<1x128xf32> -> vector<1x128xf32>
    %113 = arith.addf %107, %112 : vector<1x128xf32>
    %114 = vector.extract_strided_slice %64 {offsets = [0, 8, 0], sizes = [1, 1, 128], strides = [1, 1, 1]} : vector<1x9x128xbf16> to vector<1x1x128xbf16>
    %115 = vector.shape_cast %114 : vector<1x1x128xbf16> to vector<1x128xbf16>
    %c8 = arith.constant 8 : index
    %c0_136 = arith.constant 0 : index
    %c0_137 = arith.constant 0 : index
    %116 = vector.load %arg6[%c8, %c0_136, %c0_137] : memref<9x128x128xbf16, #tpu.memory_space<vmem>>, vector<1x128x128xbf16>
    %117 = vector.shape_cast %116 : vector<1x128x128xbf16> to vector<128x128xbf16>
    %cst_138 = arith.constant dense<0.000000e+00> : vector<1x128xf32>
    %118 = tpu.matmul %115, %117, %cst_138 {dimension_numbers = #tpu.dot_dimension_numbers<[1], [0], [0], [1], [0, 0, 1, 1], [], []>} : vector<1x128xbf16>, vector<128x128xbf16>, vector<1x128xf32> -> vector<1x128xf32>
    %119 = arith.addf %113, %118 : vector<1x128xf32>
    %c0_139 = arith.constant 0 : index
    %c0_140 = arith.constant 0 : index
    %120 = vector.load %arg7[%c0_139, %c0_140] : memref<1x128xf32, #tpu.memory_space<vmem>>, vector<1x128xf32>
    %121 = arith.addf %119, %120 : vector<1x128xf32>
    %c0_141 = arith.constant 0 : index
    %c0_142 = arith.constant 0 : index
    %c0_143 = arith.constant 0 : index
    %122 = vector.load %arg8[%c0_141, %c0_142, %c0_143] : memref<1x1x128xf32, #tpu.memory_space<vmem>>, vector<1x1x128xf32>
    %123 = vector.shape_cast %122 : vector<1x1x128xf32> to vector<1x128xf32>
    %124 = vector.shape_cast %121 : vector<1x128xf32> to vector<1x1x128xf32>
    tpu.vector_store %arg8[%c0_141, %c0_142, %c0_143], %124 {strides = array<i32>} : memref<1x1x128xf32, #tpu.memory_space<vmem>>, vector<1x1x128xf32>,
    return
  }
  func.func @transform_0(%arg0: i32) -> (i32, i32, i32) {
    %c0_i32 = arith.constant 0 : i32
    %c0_i32_0 = arith.constant 0 : i32
    %c0_i32_1 = arith.constant 0 : i32
    return %arg0, %c0_i32, %c0_i32_0 : i32, i32, i32
  }
  func.func @transform_1(%arg0: i32) -> (i32, i32) {
    %c0_i32 = arith.constant 0 : i32
    %c0_i32_0 = arith.constant 0 : i32
    %c0_i32_1 = arith.constant 0 : i32
    return %c0_i32, %c0_i32_0 : i32, i32
  }
  func.func @transform_2(%arg0: i32) -> (i32, i32) {
    %c0_i32 = arith.constant 0 : i32
    %c0_i32_0 = arith.constant 0 : i32
    %c0_i32_1 = arith.constant 0 : i32
    return %c0_i32, %c0_i32_0 : i32, i32
  }
  func.func @transform_3(%arg0: i32) -> (i32, i32) {
    %c0_i32 = arith.constant 0 : i32
    %c0_i32_0 = arith.constant 0 : i32
    %c0_i32_1 = arith.constant 0 : i32
    return %c0_i32, %c0_i32_0 : i32, i32
  }
  func.func @transform_4(%arg0: i32) -> (i32, i32) {
    %c0_i32 = arith.constant 0 : i32
    %c0_i32_0 = arith.constant 0 : i32
    %c0_i32_1 = arith.constant 0 : i32
    return %c0_i32, %c0_i32_0 : i32, i32
  }
  func.func @transform_5(%arg0: i32) -> (i32, i32, i32) {
    %c0_i32 = arith.constant 0 : i32
    %c0_i32_0 = arith.constant 0 : i32
    %c0_i32_1 = arith.constant 0 : i32
    %c0_i32_2 = arith.constant 0 : i32
    return %c0_i32, %c0_i32_0, %c0_i32_1 : i32, i32, i32
  }
  func.func @transform_6(%arg0: i32) -> (i32, i32) {
    %c0_i32 = arith.constant 0 : i32
    %c0_i32_0 = arith.constant 0 : i32
    %c0_i32_1 = arith.constant 0 : i32
    return %c0_i32, %c0_i32_0 : i32, i32
  }
  func.func @transform_7(%arg0: i32) -> (i32, i32, i32) {
    %c0_i32 = arith.constant 0 : i32
    %c0_i32_0 = arith.constant 0 : i32
    %c0_i32_1 = arith.constant 0 : i32
    return %arg0, %c0_i32, %c0_i32_0 : i32, i32, i32
  }
}

</mosaic_0001>

<llo_original>
// kernel: _lambda_.1
$region0: #{_lambda_.1}
  #allocation0 [shape = 'u32[]', space=smem, size = 0x4, offset = 0x4, fixed_abs, tag = 'smem constant byte address 0x4 - core index']
  #allocation1 [shape = 'u32[144,128]{1,0:T(1,128)}', space=vmem, size = 0x12000, scoped, tag = 'internal scratch']
  #allocation2 [shape = 'bf16[1,31,4]{2,1,0:T(8,128)(2,1)}', space=vmem, size = 0x2000, scoped, tag = 'scratch operand']
  #allocation3 [shape = 'f32[1,22,128]{2,1,0:T(8,128)}', space=vmem, size = 0x3000, scoped, tag = 'scratch operand']
  #allocation4 [shape = 'bf16[1,23,128]{2,1,0:T(8,128)(2,1)}', space=vmem, size = 0x1800, scoped, tag = 'scratch operand']
  #allocation5 [shape = 'f32[1,18,128]{2,1,0:T(8,128)}', space=vmem, size = 0x3000, scoped, tag = 'scratch operand']
  %s0 = inlined_call_operand.vmem [shape: bf16[2,16,4], index: 0, kind: input, shape index: {}]
  %s1 = inlined_call_operand.vmem [shape: bf16[32,128], index: 1, kind: input, shape index: {}]
  %s2 = inlined_call_operand.vmem [shape: f32[1,128], index: 2, kind: input, shape index: {}]
  %s3 = inlined_call_operand.hbm [shape: bf16[1024,128], index: 3, kind: input, shape index: {}]
  %s4 = inlined_call_operand.vmem [shape: f32[1,128], index: 4, kind: input, shape index: {}]
  %s5 = inlined_call_operand.hbm [shape: bf16[9,128,128], index: 5, kind: input, shape index: {}]
  %s6 = inlined_call_operand.vmem [shape: f32[1,128], index: 6, kind: input, shape index: {}]
  %s7 = inlined_call_operand.hbm [shape: f32[2,1,128], index: 7, kind: output, shape index: {}]
  %s8 = sld [smem:[#allocation0]]
  $region69: #{_lambda_.1} parent=0
    _
  %s10 = ssub.s32 1, %s8
  %s11 = scalar_select 0, %s10, %s8
  $region1: #{_lambda_.1} parent=0
    #allocation6 [shape = 'u8[262144]{0}', space=vmem, size = 0x40000, scoped, tag = 'input window, operand 3, single buffered']
    #allocation7 [shape = 's32[2]{0}', space=sflag, size = 0x8, scoped, tag = 'scoped memory for _lambda_.1']
    #allocation8 [shape = 's32[2]{0}', space=sflag, size = 0x8, scoped, tag = 'scoped memory for _lambda_.1']
    #allocation9 [shape = 'u8[294912]{0}', space=vmem, size = 0x48000, scoped, tag = 'input window, operand 5, single buffered']
    #allocation10 [shape = 's32[1]{0}', space=sflag, size = 0x4, scoped, tag = 'scoped memory for _lambda_.1']
    #allocation11 [shape = 'u8[1024]{0}', space=vmem, size = 0x400, scoped, tag = 'output window, operand 0']
    %12 = vsyncpa [#allocation7], 0
    %13 = vsyncpa [#allocation10], 0
    %14 = vsyncpa [#allocation8], 0
    %s15 = scalar_lea.sflag [#allocation8], 1
    %16 = vsyncpa %s15, 0
    loop: start=0, step=1, limit=4
    $region2: #{_lambda_.1} parent=1 // loop_pre_header
      _
    $region3: #{_lambda_.1} parent=1 // loop_header
      %s18 = sphi 0, %s22
      %p19 = scmp.ge.s32.totalorder %s18, 4
      %s28 = sphi 0, %s30
      %s31 = sphi 0, %s28
      %s32 = sphi 0, %s31
      %s48 = sphi 0, %s32
      %s52 = sphi 0, %s52
      %s54 = sphi 0, %s52
      %s55 = sphi 0, %s54
      %s69 = sphi 0, %s55
      %s73 = sphi 0, %s73
      %s75 = sphi 0, %s73
      %s76 = sphi 0, %s75
      %s90 = sphi 0, %s76
      %s94 = sphi 0, %s94
      %s96 = sphi 0, %s94
      %s97 = sphi 0, %s96
      %s111 = sphi 0, %s97
      %s115 = sphi 0, %s115
      %s117 = sphi 0, %s115
      %s118 = sphi 0, %s117
      %s132 = sphi 0, %s118
      %s136 = sphi 0, %s136
      %s138 = sphi 0, %s136
      %s139 = sphi 0, %s138
      %s153 = sphi 0, %s139
      %s157 = sphi 0, %s157
      %s159 = sphi 0, %s157
      %s160 = sphi 0, %s159
      %s174 = sphi 0, %s160
      %s180 = sphi 0, %s182
      %s183 = sphi 0, %s180
      %s184 = sphi 0, %s183
      %s200 = sphi 0, %s184
    $region4: #{_lambda_.1} parent=1 // loop_header_branch
      %21 = sbr.rel (%p19) target = $region8
    $region5: #{_lambda_.1} parent=1 // loop_body
      %s23 = ssub.s32 %s18, 1
      %s24 = ssub.s32 %s18, 2
      %s25 = sadd.s32 %s18, 1
      %s26 = ssub.s32 %s18, %s25
      %p27 = scmp.eq.s32.totalorder %s26, 0
      %s29 = sadd.s32 %s28, 1
      %s30 = scalar_select %p27, %s28, %s29
      %p33 = pneg %p27
      %p34 = scmp.eq.s32.totalorder %s18, 1
      %p35 = por %p33, %p34
      %p36 = scmp.ne.s32.totalorder %s28, %s31
      %p37 = scmp.eq.s32.totalorder %s18, 0
      %p38 = por %p36, %p37
      %p39 = scmp.ne.s32.totalorder %s28, %s31
      %p40 = scmp.eq.s32.totalorder %s23, 1
      %p41 = por %p39, %p40
      %p42 = scmp.ne.s32.totalorder %s31, %s32
      %p43 = scmp.eq.s32.totalorder %s23, 0
      %p44 = por %p42, %p43
      %p45 = scmp.ne.s32.totalorder %s31, %s32
      %p46 = scmp.eq.s32.totalorder %s24, 1
      %p47 = por %p45, %p46
      %p49 = scmp.ne.s32.totalorder %s32, %s48
      %p50 = scmp.eq.s32.totalorder %s24, 0
      %p51 = por %p49, %p50
      %s53 = sadd.s32 %s52, 1
      %p56 = scmp.eq.s32.totalorder %s18, 1
      %p57 = scmp.ne.s32.totalorder %s52, %s54
      %p58 = scmp.eq.s32.totalorder %s18, 0
      %p59 = por %p57, %p58
      %p60 = scmp.ne.s32.totalorder %s52, %s54
      %p61 = scmp.eq.s32.totalorder %s23, 1
      %p62 = por %p60, %p61
      %p63 = scmp.ne.s32.totalorder %s54, %s55
      %p64 = scmp.eq.s32.totalorder %s23, 0
      %p65 = por %p63, %p64
      %p66 = scmp.ne.s32.totalorder %s54, %s55
      %p67 = scmp.eq.s32.totalorder %s24, 1
      %p68 = por %p66, %p67
      %p70 = scmp.ne.s32.totalorder %s55, %s69
      %p71 = scmp.eq.s32.totalorder %s24, 0
      %p72 = por %p70, %p71
      %s74 = sadd.s32 %s73, 1
      %p77 = scmp.eq.s32.totalorder %s18, 1
      %p78 = scmp.ne.s32.totalorder %s73, %s75
      %p79 = scmp.eq.s32.totalorder %s18, 0
      %p80 = por %p78, %p79
      %p81 = scmp.ne.s32.totalorder %s73, %s75
      %p82 = scmp.eq.s32.totalorder %s23, 1
      %p83 = por %p81, %p82
      %p84 = scmp.ne.s32.totalorder %s75, %s76
      %p85 = scmp.eq.s32.totalorder %s23, 0
      %p86 = por %p84, %p85
      %p87 = scmp.ne.s32.totalorder %s75, %s76
      %p88 = scmp.eq.s32.totalorder %s24, 1
      %p89 = por %p87, %p88
      %p91 = scmp.ne.s32.totalorder %s76, %s90
      %p92 = scmp.eq.s32.totalorder %s24, 0
      %p93 = por %p91, %p92
      %s95 = sadd.s32 %s94, 1
      %p98 = scmp.eq.s32.totalorder %s18, 1
      %p99 = scmp.ne.s32.totalorder %s94, %s96
      %p100 = scmp.eq.s32.totalorder %s18, 0
      %p101 = por %p99, %p100
      %p102 = scmp.ne.s32.totalorder %s94, %s96
      %p103 = scmp.eq.s32.totalorder %s23, 1
      %p104 = por %p102, %p103
      %p105 = scmp.ne.s32.totalorder %s96, %s97
      %p106 = scmp.eq.s32.totalorder %s23, 0
      %p107 = por %p105, %p106
      %p108 = scmp.ne.s32.totalorder %s96, %s97
      %p109 = scmp.eq.s32.totalorder %s24, 1
      %p110 = por %p108, %p109
      %p112 = scmp.ne.s32.totalorder %s97, %s111
      %p113 = scmp.eq.s32.totalorder %s24, 0
      %p114 = por %p112, %p113
      %s116 = sadd.s32 %s115, 1
      %p119 = scmp.eq.s32.totalorder %s18, 1
      %p120 = scmp.ne.s32.totalorder %s115, %s117
      %p121 = scmp.eq.s32.totalorder %s18, 0
      %p122 = por %p120, %p121
      %p123 = scmp.ne.s32.totalorder %s115, %s117
      %p124 = scmp.eq.s32.totalorder %s23, 1
      %p125 = por %p123, %p124
      %p126 = scmp.ne.s32.totalorder %s117, %s118
      %p127 = scmp.eq.s32.totalorder %s23, 0
      %p128 = por %p126, %p127
      %p129 = scmp.ne.s32.totalorder %s117, %s118
      %p130 = scmp.eq.s32.totalorder %s24, 1
      %p131 = por %p129, %p130
      %p133 = scmp.ne.s32.totalorder %s118, %s132
      %p134 = scmp.eq.s32.totalorder %s24, 0
      %p135 = por %p133, %p134
      %s137 = sadd.s32 %s136, 1
      %p140 = scmp.eq.s32.totalorder %s18, 1
      %p141 = scmp.ne.s32.totalorder %s136, %s138
      %p142 = scmp.eq.s32.totalorder %s18, 0
      %p143 = por %p141, %p142
      %p144 = scmp.ne.s32.totalorder %s136, %s138
      %p145 = scmp.eq.s32.totalorder %s23, 1
      %p146 = por %p144, %p145
      %p147 = scmp.ne.s32.totalorder %s138, %s139
      %p148 = scmp.eq.s32.totalorder %s23, 0
      %p149 = por %p147, %p148
      %p150 = scmp.ne.s32.totalorder %s138, %s139
      %p151 = scmp.eq.s32.totalorder %s24, 1
      %p152 = por %p150, %p151
      %p154 = scmp.ne.s32.totalorder %s139, %s153
      %p155 = scmp.eq.s32.totalorder %s24, 0
      %p156 = por %p154, %p155
      %s158 = sadd.s32 %s157, 1
      %p161 = scmp.eq.s32.totalorder %s18, 1
      %p162 = scmp.ne.s32.totalorder %s157, %s159
      %p163 = scmp.eq.s32.totalorder %s18, 0
      %p164 = por %p162, %p163
      %p165 = scmp.ne.s32.totalorder %s157, %s159
      %p166 = scmp.eq.s32.totalorder %s23, 1
      %p167 = por %p165, %p166
      %p168 = scmp.ne.s32.totalorder %s159, %s160
      %p169 = scmp.eq.s32.totalorder %s23, 0
      %p170 = por %p168, %p169
      %p171 = scmp.ne.s32.totalorder %s159, %s160
      %p172 = scmp.eq.s32.totalorder %s24, 1
      %p173 = por %p171, %p172
      %p175 = scmp.ne.s32.totalorder %s160, %s174
      %p176 = scmp.eq.s32.totalorder %s24, 0
      %p177 = por %p175, %p176
      %s178 = ssub.s32 %s18, %s25
      %p179 = scmp.eq.s32.totalorder %s178, 0
      %s181 = sadd.s32 %s180, 1
      %s182 = scalar_select %p179, %s180, %s181
      %p185 = pneg %p179
      %p186 = scmp.eq.s32.totalorder %s18, 1
      %p187 = por %p185, %p186
      %p188 = scmp.ne.s32.totalorder %s180, %s183
      %p189 = scmp.eq.s32.totalorder %s18, 0
      %p190 = por %p188, %p189
      %p191 = scmp.ne.s32.totalorder %s180, %s183
      %p192 = scmp.eq.s32.totalorder %s23, 1
      %p193 = por %p191, %p192
      %p194 = scmp.ne.s32.totalorder %s183, %s184
      %p195 = scmp.eq.s32.totalorder %s23, 0
      %p196 = por %p194, %p195
      %p197 = scmp.ne.s32.totalorder %s183, %s184
      %p198 = scmp.eq.s32.totalorder %s24, 1
      %p199 = por %p197, %p198
      %p201 = scmp.ne.s32.totalorder %s184, %s200
      %p202 = scmp.eq.s32.totalorder %s24, 0
      %p203 = por %p201, %p202
      %p204 = scmp.le.s32.totalorder 1, %s18
      %p205 = scmp.lt.s32.totalorder %s18, 3
      %p206 = pnand %p204, %p205
      %p207 = pneg %p206
      // Predicated region
      $region9: #{_lambda_.1} parent=5 // pred_check
        _
      $region10: #{_lambda_.1} parent=5 // pred_check_branch
        %209 = sbr.rel (%p206) target = $region12
      $region11: #{_lambda_.1} parent=5 // pred_region
        %s210 = ssub.s32 %s18, 1
        // Predicated region
        $region13: #{_lambda_.1} parent=11 // pred_check
          %p211 = pneg %p65
        $region14: #{_lambda_.1} parent=11 // pred_check_branch
          %213 = sbr.rel (%p211) target = $region16
        $region15: #{_lambda_.1} parent=11 // pred_region
          _
        $region16: #{_lambda_.1} parent=11 // pred_fallthru
          _
        // Predicated region
        $region17: #{_lambda_.1} parent=11 // pred_check
          %p214 = pneg %p86
        $region18: #{_lambda_.1} parent=11 // pred_check_branch
          %216 = sbr.rel (%p214) target = $region20
        $region19: #{_lambda_.1} parent=11 // pred_region
          _
        $region20: #{_lambda_.1} parent=11 // pred_fallthru
          _
        // Predicated region
        $region21: #{_lambda_.1} parent=11 // pred_check
          %p217 = pneg %p107
        $region22: #{_lambda_.1} parent=11 // pred_check_branch
          %219 = sbr.rel (%p217) target = $region24
        $region23: #{_lambda_.1} parent=11 // pred_region
          %s221 = ssub.s32 8192, 8192
          %222 = vsyncadd [#allocation7], %s221
          %s223 = sshll.u32 [#allocation6], 4
          %s224 = int_to_ptr.vmem [resolvable:$true] %s223
          %229 = dma.hbm_to_vmem [thread:$0]  %s3, 8192, %s224, [#allocation7], 64, 64, 4
        $region24: #{_lambda_.1} parent=11 // pred_fallthru
          _
        // Predicated region
        $region25: #{_lambda_.1} parent=11 // pred_check
          %p230 = pneg %p128
        $region26: #{_lambda_.1} parent=11 // pred_check_branch
          %232 = sbr.rel (%p230) target = $region28
        $region27: #{_lambda_.1} parent=11 // pred_region
          _
        $region28: #{_lambda_.1} parent=11 // pred_fallthru
          _
        // Predicated region
        $region29: #{_lambda_.1} parent=11 // pred_check
          %p233 = pneg %p149
        $region30: #{_lambda_.1} parent=11 // pred_check_branch
          %235 = sbr.rel (%p233) target = $region32
        $region31: #{_lambda_.1} parent=11 // pred_region
          %s237 = ssub.s32 9216, 9216
          %238 = vsyncadd [#allocation10], %s237
          %s239 = sshll.u32 [#allocation9], 4
          %s240 = int_to_ptr.vmem [resolvable:$true] %s239
          %245 = dma.hbm_to_vmem [thread:$0]  %s5, 9216, %s240, [#allocation10], 64, 64, 4
        $region32: #{_lambda_.1} parent=11 // pred_fallthru
          _
        // Predicated region
        $region33: #{_lambda_.1} parent=11 // pred_check
          %p246 = pneg %p170
        $region34: #{_lambda_.1} parent=11 // pred_check_branch
          %248 = sbr.rel (%p246) target = $region36
        $region35: #{_lambda_.1} parent=11 // pred_region
          _
        $region36: #{_lambda_.1} parent=11 // pred_fallthru
          _
      $region12: #{_lambda_.1} parent=5 // pred_fallthru
        _
      %p249 = scmp.lt.s32.totalorder %s18, 2
      // Predicated region
      $region37: #{_lambda_.1} parent=5 // pred_check
        %p250 = pneg %p249
      $region38: #{_lambda_.1} parent=5 // pred_check_branch
        %252 = sbr.rel (%p250) target = $region40
      $region39: #{_lambda_.1} parent=5 // pred_region
        // Predicated region
        $region41: #{_lambda_.1} parent=39 // pred_check
          %p253 = pneg %p38
        $region42: #{_lambda_.1} parent=39 // pred_check_branch
          %255 = sbr.rel (%p253) target = $region44
        $region43: #{_lambda_.1} parent=39 // pred_region
          %p256 = scmp.lt.s32.totalorder %s18, 1
          %s257 = scalar_select %p256, %s18, 1
          %s258 = smul.addr %s257, 2
          %s259 = smul.addr %s258, 4
          %s260 = scalar_lea.vmem %s0, %s259
        $region44: #{_lambda_.1} parent=39 // pred_fallthru
          _
      $region40: #{_lambda_.1} parent=5 // pred_fallthru
        _
      %p261 = scmp.le.s32.totalorder 1, %s18
      %p262 = scmp.lt.s32.totalorder %s18, 3
      %p263 = pnand %p261, %p262
      %p264 = pneg %p263
      // Predicated region
      $region45: #{_lambda_.1} parent=5 // pred_check
        _
      $region46: #{_lambda_.1} parent=5 // pred_check_branch
        %266 = sbr.rel (%p263) target = $region48
      $region47: #{_lambda_.1} parent=5 // pred_region
        %s267 = ssub.s32 %s18, 1
        // Predicated region
        $region49: #{_lambda_.1} parent=47 // pred_check
          %p268 = pneg %p107
        $region50: #{_lambda_.1} parent=47 // pred_check_branch
          %270 = sbr.rel (%p268) target = $region52
        $region51: #{_lambda_.1} parent=47 // pred_region
          %271 = dma.done [#allocation7], 8192
        $region52: #{_lambda_.1} parent=47 // pred_fallthru
          _
        // Predicated region
        $region53: #{_lambda_.1} parent=47 // pred_check
          %p272 = pneg %p149
        $region54: #{_lambda_.1} parent=47 // pred_check_branch
          %274 = sbr.rel (%p272) target = $region56
        $region55: #{_lambda_.1} parent=47 // pred_region
          %275 = dma.done [#allocation10], 9216
        $region56: #{_lambda_.1} parent=47 // pred_fallthru
          _
        %p276 = scmp.lt.s32.totalorder %s23, 1
        %s277 = scalar_select %p276, %s23, 1
        %s278 = smul.addr %s277, 2
        %s279 = smul.addr %s278, 4
        %s280 = scalar_lea.vmem %s0, %s279
        %p281 = pneg %p44
        %p282 = pneg %p41
        %p283 = pneg %p65
        %p284 = pneg %p62
        %p285 = pneg %p86
        %p286 = pneg %p83
        %p287 = pneg %p107
        %p288 = pneg %p104
        %p289 = pneg %p128
        %p290 = pneg %p125
        %p291 = pneg %p149
        %p292 = pneg %p146
        %p293 = pneg %p170
        %p294 = pneg %p167
        %p295 = pneg %p196
        %p296 = pneg %p193
        %s297 = sand.u32 %s183, 1
        %s298 = scalar_lea.sflag [#allocation8], %s297
        %s299 = sand.u32 %s183, 1
        %s300 = scalar_lea.vmem [#allocation11], %s299
        %p301 = scmp.lt.s32.totalorder %s23, 1
        %s302 = scalar_select %p301, %s23, 1
        %s303 = smul.addr %s302, 2
        %s304 = smul.addr %s303, 4
        %s305 = scalar_lea.vmem %s0, %s304
        %v307 = vld [vmem:[%s305] sm:$0xf]
        %v308 = vld [vmem:[%s305 + $0x4] sm:$0xf]
        %vm309 = vcmask 26624
        %310 = vst.msk [vmem:[#allocation2] sm:$0x7] %vm309, 0
        %vm311 = vcmask 27651
        %312 = vst.msk [vmem:[#allocation2 + $0x8] sm:$0x8] %vm311, 0
        %vm313 = vcmask 27648
        %vm314 = vsmask.f32 3328
        %vm315 = vmand %vm313, %vm314
        %v316 = vld [vmem:[#allocation2 + $0xc] sm:$0xf]
        %v317 = vsel %vm315, 0, %v316
        %318 = vst [vmem:[#allocation2 + $0xc] sm:$0xf] %v317
        %vm321 = vcmask 1042432
        %vm322 = vcmask 1046532
        %vm323 = vmor %vm321, %vm322
        %v324 = vrot.slane %v307, 5
        %v325 = vrot.slane %v324, 4
        %v326 = vrot.slane %v308, 5
        %v327 = vsel %vm323, %v325, %v326
        %v328 = vrot.slane %v326, 4
        %332 = vst.msk [vmem:[#allocation2] sm:$0x8] %vm311, %v324
        %vm333 = vcmask 27648
        %334 = vst.msk [vmem:[#allocation2 + $0x4] sm:$0xf] %vm333, %v327
        %335 = vst.msk [vmem:[#allocation2 + $0x8] sm:$0x7] %vm309, %v328
        %v336 = vld [vmem:[#allocation2] sm:$0xf]
        %v337 = vld [vmem:[#allocation2 + $0x4] sm:$0xf]
        %v338 = vld [vmem:[#allocation2 + $0x8] sm:$0xf]
        %v339 = vld [vmem:[#allocation2 + $0xc] sm:$0x1]
        %v340 = vld [vmem:[#allocation2] sm:$0xe]
        %v341 = vld [vmem:[#allocation2 + $0xc] sm:$0x3]
        %v342 = vld [vmem:[#allocation2] sm:$0xc]
        %v343 = vld [vmem:[#allocation2 + $0xc] sm:$0x7]
        %v344 = vld [vmem:[#allocation2] sm:$0x8]
        %v345 = vld [vmem:[#allocation2 + $0xc] sm:$0xf]
        %v349 = vunpack.c.l.b16 %v336
        %v350 = vunpack.c.l.b16 %v337
        %v351 = vunpack.c.l.b16 %v338
        %v352 = vpack.c.b16 %v350, %v349
        %v353 = vpack.c.b16 %v351, %v351
        %v355 = vunpack.c.l.b16 %v339
        %v356 = vpack.c.b16 %v355, %v351
        %vm357 = vsmask.f32 7424
        %v359 = vshrl.u32 %v352, 16
        %v361 = vshll.u32 %v352, 16
        %v363 = vrot.slane %v361, 1
        %v364 = vor.u32 %v359, %v363
        %v366 = vshll.u32 %v356, 16
        %v368 = vrot.slane %v366, 1
        %v369 = vsel %vm357, %v364, %v368
        %v370 = vshrl.u32 %v356, 16
        %v372 = vor.u32 %v370, %v368
        %373 = vrot.lane.b32.xlu0 %v369, 4
        %v374 = vpop.permute.xlu0 %373
        %375 = vrot.lane.b32.xlu0 %v372, 4
        %v376 = vpop.permute.xlu0 %375
        %v378 = vunpack.c.l.b16 %v340
        %v379 = vpack.c.b16 %v350, %v378
        %vm380 = vcmask 1046528
        %v381 = vrot.slane %v379, 1
        %v382 = vrot.slane %v356, 1
        %v383 = vsel %vm380, %v381, %v382
        %384 = vrot.lane.b32.xlu0 %v383, 8
        %v385 = vpop.permute.xlu0 %384
        %386 = vrot.lane.b32.xlu0 %v382, 8
        %v387 = vpop.permute.xlu0 %386
        %v389 = vunpack.c.l.b16 %v341
        %v390 = vpack.c.b16 %v389, %v351
        %vm391 = vsmask.f32 6400
        %v393 = vshrl.u32 %v379, 16
        %v395 = vrot.slane %v393, 1
        %v396 = vshll.u32 %v379, 16
        %v398 = vrot.slane %v396, 2
        %v399 = vor.u32 %v395, %v398
        %v401 = vshrl.u32 %v390, 16
        %v403 = vrot.slane %v401, 1
        %v404 = vshll.u32 %v390, 16
        %v406 = vrot.slane %v404, 2
        %v407 = vor.u32 %v403, %v406
        %v408 = vsel %vm391, %v399, %v407
        %409 = vrot.lane.b32.xlu0 %v408, 12
        %v410 = vpop.permute.xlu0 %409
        %411 = vrot.lane.b32.xlu0 %v407, 12
        %v412 = vpop.permute.xlu0 %411
        %v414 = vunpack.c.l.b16 %v342
        %v415 = vpack.c.b16 %v350, %v414
        %vm416 = vcmask 1045504
        %v417 = vrot.slane %v415, 2
        %v418 = vrot.slane %v390, 2
        %v419 = vsel %vm416, %v417, %v418
        %420 = vrot.lane.b32.xlu0 %v419, 16
        %v421 = vpop.permute.xlu0 %420
        %422 = vrot.lane.b32.xlu0 %v418, 16
        %v423 = vpop.permute.xlu0 %422
        %v425 = vunpack.c.l.b16 %v343
        %v426 = vpack.c.b16 %v425, %v351
        %vm427 = vsmask.f32 5376
        %v429 = vshrl.u32 %v415, 16
        %v431 = vrot.slane %v429, 2
        %v432 = vshll.u32 %v415, 16
        %v434 = vrot.slane %v432, 3
        %v435 = vor.u32 %v431, %v434
        %v437 = vshrl.u32 %v426, 16
        %v439 = vrot.slane %v437, 2
        %v440 = vshll.u32 %v426, 16
        %v442 = vrot.slane %v440, 3
        %v443 = vor.u32 %v439, %v442
        %v444 = vsel %vm427, %v435, %v443
        %445 = vrot.lane.b32.xlu0 %v444, 20
        %v446 = vpop.permute.xlu0 %445
        %447 = vrot.lane.b32.xlu0 %v443, 20
        %v448 = vpop.permute.xlu0 %447
        %v450 = vunpack.c.l.b16 %v344
        %v451 = vpack.c.b16 %v350, %v450
        %vm452 = vcmask 1044480
        %v453 = vrot.slane %v451, 3
        %v454 = vrot.slane %v426, 3
        %v455 = vsel %vm452, %v453, %v454
        %456 = vrot.lane.b32.xlu0 %v455, 24
        %v457 = vpop.permute.xlu0 %456
        %458 = vrot.lane.b32.xlu0 %v454, 24
        %v459 = vpop.permute.xlu0 %458
        %v461 = vunpack.c.l.b16 %v345
        %v462 = vpack.c.b16 %v461, %v351
        %vm463 = vsmask.f32 4352
        %v465 = vshrl.u32 %v451, 16
        %v467 = vrot.slane %v465, 3
        %v468 = vshll.u32 %v451, 16
        %v470 = vrot.slane %v468, 4
        %v471 = vor.u32 %v467, %v470
        %v473 = vshrl.u32 %v462, 16
        %v475 = vrot.slane %v473, 3
        %v476 = vshll.u32 %v462, 16
        %v478 = vrot.slane %v476, 4
        %v479 = vor.u32 %v475, %v478
        %v480 = vsel %vm463, %v471, %v479
        %481 = vrot.lane.b32.xlu0 %v480, 28
        %v482 = vpop.permute.xlu0 %481
        %483 = vrot.lane.b32.xlu0 %v479, 28
        %v484 = vpop.permute.xlu0 %483
        %vm485 = vcmask 31744
        %v487 = vsel %vm485, %v352, %v374
        %v490 = vsel %vm485, %v353, %v376
        %vm491 = vcmask 64512
        %v493 = vsel %vm491, %v487, %v385
        %v495 = vsel %vm491, %v490, %v387
        %vm496 = vcmask 97280
        %v498 = vsel %vm496, %v493, %v410
        %v500 = vsel %vm496, %v495, %v412
        %vm501 = vcmask 130048
        %v503 = vsel %vm501, %v498, %v421
        %v505 = vsel %vm501, %v500, %v423
        %vm506 = vcmask 162816
        %v508 = vsel %vm506, %v503, %v446
        %v510 = vsel %vm506, %v505, %v448
        %vm511 = vcmask 195584
        %v513 = vsel %vm511, %v508, %v457
        %v515 = vsel %vm511, %v510, %v459
        %vm516 = vcmask 228352
        %v518 = vsel %vm516, %v513, %v482
        %v520 = vsel %vm516, %v515, %v484
        %v521 = vld [vmem:[%s1] sm:$0xf]
        %v522 = vld [vmem:[%s1 + $0x4] sm:$0xf]
        %v523 = vld [vmem:[%s1 + $0x8] sm:$0xf]
        %v524 = vld [vmem:[%s1 + $0xc] sm:$0xf]
        %v529 = vunpack.c.l.b16 %v521
        %v530 = vunpack.c.l.b16 %v522
        %v531 = vunpack.c.l.b16 %v523
        %v532 = vunpack.c.l.b16 %v524
        %v533 = vpack.c.b16 %v530, %v529
        %v534 = vpack.c.b16 %v532, %v531
        %vm537 = vcmask 261120
        %v538 = vsel %vm537, %v518, 0
        %v540 = vsel %vm537, %v520, 0
        %542 = vmatprep.subr.bf16.mxu0 0
        %543 = vmatpush1.bf16.msra.mxu0 0
        %544 = vmatprep.subr.bf16.mxu0 0
        %545 = vmatpush1.bf16.msra.mxu0 0
        %546 = vmatprep.subr.bf16.mxu0 0
        %547 = vmatpush1.bf16.msra.mxu0 0
        %548 = vmatprep.subr.bf16.mxu0 0
        %549 = vmatpush1.bf16.msra.mxu0 0
        %550 = vmatprep.subr.bf16.mxu0 0
        %551 = vmatpush1.bf16.msra.mxu0 0
        %552 = vmatprep.subr.bf16.mxu0 0
        %553 = vmatpush1.bf16.msra.mxu0 0
        %554 = vmatprep.subr.bf16.mxu0 0
        %555 = vmatpush1.bf16.msra.mxu0 %v534
        %556 = vmatprep.subr.bf16.mxu0 0
        %557 = vmatpush1.bf16.msra.mxu0 %v533
        %558 = vmatprep.subr.bf16.mxu0 0
        %559 = vmatpush2.bf16.msra.mxu0 0
        %560 = vmatprep.subr.bf16.mxu0 0
        %561 = vmatpush2.bf16.msra.mxu0 0
        %562 = vmatprep.subr.bf16.mxu0 0
        %563 = vmatpush2.bf16.msra.mxu0 0
        %564 = vmatprep.subr.bf16.mxu0 0
        %565 = vmatpush2.bf16.msra.mxu0 0
        %566 = vmatprep.subr.bf16.mxu0 0
        %567 = vmatpush2.bf16.msra.mxu0 0
        %568 = vmatprep.subr.bf16.mxu0 0
        %569 = vmatpush2.bf16.msra.mxu0 0
        %570 = vmatprep.subr.bf16.mxu0 0
        %571 = vmatpush2.bf16.msra.mxu0 0
        %572 = vmatprep.subr.bf16.mxu0 0
        %573 = vmatpush2.bf16.msra.mxu0 0
        %574 = vmatprep.mubr.bf16.mxu0 0
        %575 = vmatmul.mubr.bf16.gmra.mxu0 %v538
        %v576 = vpop.f32.mrf.mxu0
        %v577 = vadd.f32 0.0, %v576
        %v578 = vpop.f32.mrf.mxu0
        %v579 = vpop.f32.mrf.mxu0
        %v580 = vadd.f32 0.0, %v579
        %v581 = vpop.f32.mrf.mxu0
        %582 = vmatprep.mubr.bf16.mxu0 0
        %583 = vmatmul.mubr.bf16.gmra.mxu0 %v540
        %v584 = vpop.f32.mrf.mxu0
        %v585 = vadd.f32 0.0, %v584
        %v586 = vpop.f32.mrf.mxu0
        %v587 = vpop.f32.mrf.mxu0
        %v588 = vpop.f32.mrf.mxu0
        %589 = vdwg.mxu0
        %590 = vst [vmem:[#allocation3] sm:$0x1] -inf
        %591 = vst [vmem:[#allocation3 + $0x1] sm:$0xff] %v577
        %592 = vst [vmem:[#allocation3 + $0x9] sm:$0xff] %v580
        %593 = vst [vmem:[#allocation3 + $0x11] sm:$0x1f] %v585
        %v594 = vld [vmem:[#allocation3] ss:$2 sm:$0xff]
        %s595 = scalar_lea.vmem [#allocation3], 16
        %v596 = vld [vmem:[%s595] ss:$2 sm:$0x7]
        %s597 = scalar_lea.vmem [#allocation3], 1
        %v598 = vld [vmem:[%s597] ss:$2 sm:$0xff]
        %s599 = scalar_lea.vmem [#allocation3], 17
        %v600 = vld [vmem:[%s599] ss:$2 sm:$0x7]
        %v601 = vmax.f32 %v594, %v598
        %v602 = vmax.f32 %v596, %v600
        %v603 = vld [vmem:[%s2] sm:$0x1]
        %v605 = vlaneseq
        %v606 = vshrl.u32 %v605, 7
        %v607 = vsub.s32 0, %v606
        %v608 = vrot.slane %v603, %v607
        %v610 = vadd.f32 %v601, %v608
        %v611 = vadd.f32 %v602, %v608
        %v612 = vmax.f32 %v610, 0.0
        %v613 = vmax.f32 %v611, 0.0
        %v614 = vpack.c.bf16 %v613, %v612
        %615 = vst [vmem:[#allocation4] sm:$0x7] 0
        %vm616 = vcmask 1043456
        %vm617 = vsmask.f32 3330
        %vm618 = vmand %vm616, %vm617
        %v619 = vld [vmem:[#allocation4 + $0x8] sm:$0xf]
        %v620 = vsel %vm618, 0, %v619
        %621 = vst [vmem:[#allocation4 + $0x8] sm:$0xf] %v620
        %v623 = vunpack.c.l.b16 %v614
        %v624 = vunpack.c.h.b16 %v614
        %v625 = vpack.c.b16 %v623, %v623
        %v626 = vpack.c.b16 %v624, %v624
        %v627 = vrot.slane %v625, 5
        %v628 = vrot.slane %v627, 4
        %v629 = vrot.slane %v626, 5
        %v630 = vsel %vm323, %v628, %v629
        %v631 = vrot.slane %v629, 4
        %635 = vst [vmem:[#allocation4] sm:$0x8] %v627
        %636 = vst [vmem:[#allocation4 + $0x4] sm:$0xf] %v630
        %vm637 = vcmask 1040384
        %vm638 = vsmask.f32 256
        %vm639 = vmand %vm637, %vm638
        %v640 = vld [vmem:[#allocation4 + $0x8] sm:$0x1]
        %v641 = vsel %vm639, %v631, %v640
        %642 = vst [vmem:[#allocation4 + $0x8] sm:$0x1] %v641
        %v643 = vld [vmem:[#allocation4] sm:$0xf]
        %v644 = vld [vmem:[#allocation4 + $0x4] sm:$0xf]
        %v645 = vld [vmem:[#allocation4 + $0x8] sm:$0x1]
        %v646 = vld [vmem:[#allocation4] sm:$0xe]
        %v647 = vld [vmem:[#allocation4 + $0x8] sm:$0x3]
        %v648 = vld [vmem:[#allocation4] sm:$0xc]
        %v649 = vld [vmem:[#allocation4 + $0x8] sm:$0x7]
        %v650 = vld [vmem:[#allocation4] sm:$0x8]
        %v651 = vld [vmem:[#allocation4 + $0x8] sm:$0xf]
        %v654 = vunpack.c.l.b16 %v643
        %v655 = vunpack.c.l.b16 %v644
        %v656 = vpack.c.b16 %v655, %v654
        %v659 = vunpack.c.l.b16 %v645
        %v660 = vpack.c.b16 %v659, %v659
        %v662 = vshrl.u32 %v656, 16
        %v664 = vshll.u32 %v656, 16
        %v666 = vrot.slane %v664, 1
        %v667 = vor.u32 %v662, %v666
        %v669 = vshll.u32 %v660, 16
        %v671 = vrot.slane %v669, 1
        %v672 = vsel %vm357, %v667, %v671
        %v675 = vunpack.c.l.b16 %v646
        %v676 = vpack.c.b16 %v655, %v675
        %v677 = vrot.slane %v676, 1
        %v678 = vrot.slane %v660, 1
        %v679 = vsel %vm380, %v677, %v678
        %v682 = vunpack.c.l.b16 %v647
        %v683 = vpack.c.b16 %v682, %v682
        %v685 = vshrl.u32 %v676, 16
        %v687 = vrot.slane %v685, 1
        %v688 = vshll.u32 %v676, 16
        %v690 = vrot.slane %v688, 2
        %v691 = vor.u32 %v687, %v690
        %v693 = vshrl.u32 %v683, 16
        %v695 = vrot.slane %v693, 1
        %v696 = vshll.u32 %v683, 16
        %v698 = vrot.slane %v696, 2
        %v699 = vor.u32 %v695, %v698
        %v700 = vsel %vm391, %v691, %v699
        %v703 = vunpack.c.l.b16 %v648
        %v704 = vpack.c.b16 %v655, %v703
        %v705 = vrot.slane %v704, 2
        %v706 = vrot.slane %v683, 2
        %v707 = vsel %vm416, %v705, %v706
        %v710 = vunpack.c.l.b16 %v649
        %v711 = vpack.c.b16 %v710, %v710
        %v713 = vshrl.u32 %v704, 16
        %v715 = vrot.slane %v713, 2
        %v716 = vshll.u32 %v704, 16
        %v718 = vrot.slane %v716, 3
        %v719 = vor.u32 %v715, %v718
        %v721 = vshrl.u32 %v711, 16
        %v723 = vrot.slane %v721, 2
        %v724 = vshll.u32 %v711, 16
        %v726 = vrot.slane %v724, 3
        %v727 = vor.u32 %v723, %v726
        %v728 = vsel %vm427, %v719, %v727
        %v731 = vunpack.c.l.b16 %v650
        %v732 = vpack.c.b16 %v655, %v731
        %v733 = vrot.slane %v732, 3
        %v734 = vrot.slane %v711, 3
        %v735 = vsel %vm452, %v733, %v734
        %v738 = vunpack.c.l.b16 %v651
        %v739 = vpack.c.b16 %v738, %v738
        %v741 = vshrl.u32 %v732, 16
        %v743 = vrot.slane %v741, 3
        %v744 = vshll.u32 %v732, 16
        %v746 = vrot.slane %v744, 4
        %v747 = vor.u32 %v743, %v746
        %v749 = vshrl.u32 %v739, 16
        %v751 = vrot.slane %v749, 3
        %v752 = vshll.u32 %v739, 16
        %v754 = vrot.slane %v752, 4
        %v755 = vor.u32 %v751, %v754
        %v756 = vsel %vm463, %v747, %v755
        %v758 = vld [vmem:[#allocation6] sm:$0xf]
        %v759 = vld [vmem:[#allocation6 + $0x4] sm:$0xf]
        %v760 = vld [vmem:[#allocation6 + $0x8] sm:$0xf]
        %v761 = vld [vmem:[#allocation6 + $0xc] sm:$0xf]
        %v762 = vld [vmem:[#allocation6 + $0x10] sm:$0xf]
        %v763 = vld [vmem:[#allocation6 + $0x14] sm:$0xf]
        %v764 = vld [vmem:[#allocation6 + $0x18] sm:$0xf]
        %v765 = vld [vmem:[#allocation6 + $0x1c] sm:$0xf]
        %v766 = vld [vmem:[#allocation6 + $0x20] sm:$0xf]
        %v767 = vld [vmem:[#allocation6 + $0x24] sm:$0xf]
        %v768 = vld [vmem:[#allocation6 + $0x28] sm:$0xf]
        %v769 = vld [vmem:[#allocation6 + $0x2c] sm:$0xf]
        %v770 = vld [vmem:[#allocation6 + $0x30] sm:$0xf]
        %v771 = vld [vmem:[#allocation6 + $0x34] sm:$0xf]
        %v772 = vld [vmem:[#allocation6 + $0x38] sm:$0xf]
        %v773 = vld [vmem:[#allocation6 + $0x3c] sm:$0xf]
        %v774 = vld [vmem:[#allocation6 + $0x40] sm:$0xf]
        %v775 = vld [vmem:[#allocation6 + $0x44] sm:$0xf]
        %v776 = vld [vmem:[#allocation6 + $0x48] sm:$0xf]
        %v777 = vld [vmem:[#allocation6 + $0x4c] sm:$0xf]
        %v778 = vld [vmem:[#allocation6 + $0x50] sm:$0xf]
        %v779 = vld [vmem:[#allocation6 + $0x54] sm:$0xf]
        %v780 = vld [vmem:[#allocation6 + $0x58] sm:$0xf]
        %v781 = vld [vmem:[#allocation6 + $0x5c] sm:$0xf]
        %v782 = vld [vmem:[#allocation6 + $0x60] sm:$0xf]
        %v783 = vld [vmem:[#allocation6 + $0x64] sm:$0xf]
        %v784 = vld [vmem:[#allocation6 + $0x68] sm:$0xf]
        %v785 = vld [vmem:[#allocation6 + $0x6c] sm:$0xf]
        %v786 = vld [vmem:[#allocation6 + $0x70] sm:$0xf]
        %v787 = vld [vmem:[#allocation6 + $0x74] sm:$0xf]
        %v788 = vld [vmem:[#allocation6 + $0x78] sm:$0xf]
        %v789 = vld [vmem:[#allocation6 + $0x7c] sm:$0xf]
        %v790 = vld [vmem:[#allocation6 + $0x80] sm:$0xf]
        %v791 = vld [vmem:[#allocation6 + $0x84] sm:$0xf]
        %v792 = vld [vmem:[#allocation6 + $0x88] sm:$0xf]
        %v793 = vld [vmem:[#allocation6 + $0x8c] sm:$0xf]
        %v794 = vld [vmem:[#allocation6 + $0x90] sm:$0xf]
        %v795 = vld [vmem:[#allocation6 + $0x94] sm:$0xf]
        %v796 = vld [vmem:[#allocation6 + $0x98] sm:$0xf]
        %v797 = vld [vmem:[#allocation6 + $0x9c] sm:$0xf]
        %v798 = vld [vmem:[#allocation6 + $0xa0] sm:$0xf]
        %v799 = vld [vmem:[#allocation6 + $0xa4] sm:$0xf]
        %v800 = vld [vmem:[#allocation6 + $0xa8] sm:$0xf]
        %v801 = vld [vmem:[#allocation6 + $0xac] sm:$0xf]
        %v802 = vld [vmem:[#allocation6 + $0xb0] sm:$0xf]
        %v803 = vld [vmem:[#allocation6 + $0xb4] sm:$0xf]
        %v804 = vld [vmem:[#allocation6 + $0xb8] sm:$0xf]
        %v805 = vld [vmem:[#allocation6 + $0xbc] sm:$0xf]
        %v806 = vld [vmem:[#allocation6 + $0xc0] sm:$0xf]
        %v807 = vld [vmem:[#allocation6 + $0xc4] sm:$0xf]
        %v808 = vld [vmem:[#allocation6 + $0xc8] sm:$0xf]
        %v809 = vld [vmem:[#allocation6 + $0xcc] sm:$0xf]
        %v810 = vld [vmem:[#allocation6 + $0xd0] sm:$0xf]
        %v811 = vld [vmem:[#allocation6 + $0xd4] sm:$0xf]
        %v812 = vld [vmem:[#allocation6 + $0xd8] sm:$0xf]
        %v813 = vld [vmem:[#allocation6 + $0xdc] sm:$0xf]
        %v814 = vld [vmem:[#allocation6 + $0xe0] sm:$0xf]
        %v815 = vld [vmem:[#allocation6 + $0xe4] sm:$0xf]
        %v816 = vld [vmem:[#allocation6 + $0xe8] sm:$0xf]
        %v817 = vld [vmem:[#allocation6 + $0xec] sm:$0xf]
        %v818 = vld [vmem:[#allocation6 + $0xf0] sm:$0xf]
        %v819 = vld [vmem:[#allocation6 + $0xf4] sm:$0xf]
        %v820 = vld [vmem:[#allocation6 + $0xf8] sm:$0xf]
        %v821 = vld [vmem:[#allocation6 + $0xfc] sm:$0xf]
        %v822 = vld [vmem:[#allocation6 + $0x100] sm:$0xf]
        %v823 = vld [vmem:[#allocation6 + $0x104] sm:$0xf]
        %v824 = vld [vmem:[#allocation6 + $0x108] sm:$0xf]
        %v825 = vld [vmem:[#allocation6 + $0x10c] sm:$0xf]
        %v826 = vld [vmem:[#allocation6 + $0x110] sm:$0xf]
        %v827 = vld [vmem:[#allocation6 + $0x114] sm:$0xf]
        %v828 = vld [vmem:[#allocation6 + $0x118] sm:$0xf]
        %v829 = vld [vmem:[#allocation6 + $0x11c] sm:$0xf]
        %v830 = vld [vmem:[#allocation6 + $0x120] sm:$0xf]
        %v831 = vld [vmem:[#allocation6 + $0x124] sm:$0xf]
        %v832 = vld [vmem:[#allocation6 + $0x128] sm:$0xf]
        %v833 = vld [vmem:[#allocation6 + $0x12c] sm:$0xf]
        %v834 = vld [vmem:[#allocation6 + $0x130] sm:$0xf]
        %v835 = vld [vmem:[#allocation6 + $0x134] sm:$0xf]
        %v836 = vld [vmem:[#allocation6 + $0x138] sm:$0xf]
        %v837 = vld [vmem:[#allocation6 + $0x13c] sm:$0xf]
        %v838 = vld [vmem:[#allocation6 + $0x140] sm:$0xf]
        %v839 = vld [vmem:[#allocation6 + $0x144] sm:$0xf]
        %v840 = vld [vmem:[#allocation6 + $0x148] sm:$0xf]
        %v841 = vld [vmem:[#allocation6 + $0x14c] sm:$0xf]
        %v842 = vld [vmem:[#allocation6 + $0x150] sm:$0xf]
        %v843 = vld [vmem:[#allocation6 + $0x154] sm:$0xf]
        %v844 = vld [vmem:[#allocation6 + $0x158] sm:$0xf]
        %v845 = vld [vmem:[#allocation6 + $0x15c] sm:$0xf]
        %v846 = vld [vmem:[#allocation6 + $0x160] sm:$0xf]
        %v847 = vld [vmem:[#allocation6 + $0x164] sm:$0xf]
        %v848 = vld [vmem:[#allocation6 + $0x168] sm:$0xf]
        %v849 = vld [vmem:[#allocation6 + $0x16c] sm:$0xf]
        %v850 = vld [vmem:[#allocation6 + $0x170] sm:$0xf]
        %v851 = vld [vmem:[#allocation6 + $0x174] sm:$0xf]
        %v852 = vld [vmem:[#allocation6 + $0x178] sm:$0xf]
        %v853 = vld [vmem:[#allocation6 + $0x17c] sm:$0xf]
        %v854 = vld [vmem:[#allocation6 + $0x180] sm:$0xf]
        %v855 = vld [vmem:[#allocation6 + $0x184] sm:$0xf]
        %v856 = vld [vmem:[#allocation6 + $0x188] sm:$0xf]
        %v857 = vld [vmem:[#allocation6 + $0x18c] sm:$0xf]
        %v858 = vld [vmem:[#allocation6 + $0x190] sm:$0xf]
        %v859 = vld [vmem:[#allocation6 + $0x194] sm:$0xf]
        %v860 = vld [vmem:[#allocation6 + $0x198] sm:$0xf]
        %v861 = vld [vmem:[#allocation6 + $0x19c] sm:$0xf]
        %v862 = vld [vmem:[#allocation6 + $0x1a0] sm:$0xf]
        %v863 = vld [vmem:[#allocation6 + $0x1a4] sm:$0xf]
        %v864 = vld [vmem:[#allocation6 + $0x1a8] sm:$0xf]
        %v865 = vld [vmem:[#allocation6 + $0x1ac] sm:$0xf]
        %v866 = vld [vmem:[#allocation6 + $0x1b0] sm:$0xf]
        %v867 = vld [vmem:[#allocation6 + $0x1b4] sm:$0xf]
        %v868 = vld [vmem:[#allocation6 + $0x1b8] sm:$0xf]
        %v869 = vld [vmem:[#allocation6 + $0x1bc] sm:$0xf]
        %v870 = vld [vmem:[#allocation6 + $0x1c0] sm:$0xf]
        %v871 = vld [vmem:[#allocation6 + $0x1c4] sm:$0xf]
        %v872 = vld [vmem:[#allocation6 + $0x1c8] sm:$0xf]
        %v873 = vld [vmem:[#allocation6 + $0x1cc] sm:$0xf]
        %v874 = vld [vmem:[#allocation6 + $0x1d0] sm:$0xf]
        %v875 = vld [vmem:[#allocation6 + $0x1d4] sm:$0xf]
        %v876 = vld [vmem:[#allocation6 + $0x1d8] sm:$0xf]
        %v877 = vld [vmem:[#allocation6 + $0x1dc] sm:$0xf]
        %v878 = vld [vmem:[#allocation6 + $0x1e0] sm:$0xf]
        %v879 = vld [vmem:[#allocation6 + $0x1e4] sm:$0xf]
        %v880 = vld [vmem:[#allocation6 + $0x1e8] sm:$0xf]
        %v881 = vld [vmem:[#allocation6 + $0x1ec] sm:$0xf]
        %v882 = vld [vmem:[#allocation6 + $0x1f0] sm:$0xf]
        %v883 = vld [vmem:[#allocation6 + $0x1f4] sm:$0xf]
        %v884 = vld [vmem:[#allocation6 + $0x1f8] sm:$0xf]
        %v885 = vld [vmem:[#allocation6 + $0x1fc] sm:$0xf]
        %v1014 = vunpack.c.l.b16 %v758
        %v1015 = vunpack.c.l.b16 %v759
        %v1016 = vunpack.c.l.b16 %v760
        %v1017 = vunpack.c.l.b16 %v761
        %v1018 = vunpack.c.l.b16 %v762
        %v1019 = vunpack.c.l.b16 %v763
        %v1020 = vunpack.c.l.b16 %v764
        %v1021 = vunpack.c.l.b16 %v765
        %v1022 = vunpack.c.l.b16 %v766
        %v1023 = vunpack.c.l.b16 %v767
        %v1024 = vunpack.c.l.b16 %v768
        %v1025 = vunpack.c.l.b16 %v769
        %v1026 = vunpack.c.l.b16 %v770
        %v1027 = vunpack.c.l.b16 %v771
        %v1028 = vunpack.c.l.b16 %v772
        %v1029 = vunpack.c.l.b16 %v773
        %v1030 = vunpack.c.l.b16 %v774
        %v1031 = vunpack.c.l.b16 %v775
        %v1032 = vunpack.c.l.b16 %v776
        %v1033 = vunpack.c.l.b16 %v777
        %v1034 = vunpack.c.l.b16 %v778
        %v1035 = vunpack.c.l.b16 %v779
        %v1036 = vunpack.c.l.b16 %v780
        %v1037 = vunpack.c.l.b16 %v781
        %v1038 = vunpack.c.l.b16 %v782
        %v1039 = vunpack.c.l.b16 %v783
        %v1040 = vunpack.c.l.b16 %v784
        %v1041 = vunpack.c.l.b16 %v785
        %v1042 = vunpack.c.l.b16 %v786
        %v1043 = vunpack.c.l.b16 %v787
        %v1044 = vunpack.c.l.b16 %v788
        %v1045 = vunpack.c.l.b16 %v789
        %v1046 = vunpack.c.l.b16 %v790
        %v1047 = vunpack.c.l.b16 %v791
        %v1048 = vunpack.c.l.b16 %v792
        %v1049 = vunpack.c.l.b16 %v793
        %v1050 = vunpack.c.l.b16 %v794
        %v1051 = vunpack.c.l.b16 %v795
        %v1052 = vunpack.c.l.b16 %v796
        %v1053 = vunpack.c.l.b16 %v797
        %v1054 = vunpack.c.l.b16 %v798
        %v1055 = vunpack.c.l.b16 %v799
        %v1056 = vunpack.c.l.b16 %v800
        %v1057 = vunpack.c.l.b16 %v801
        %v1058 = vunpack.c.l.b16 %v802
        %v1059 = vunpack.c.l.b16 %v803
        %v1060 = vunpack.c.l.b16 %v804
        %v1061 = vunpack.c.l.b16 %v805
        %v1062 = vunpack.c.l.b16 %v806
        %v1063 = vunpack.c.l.b16 %v807
        %v1064 = vunpack.c.l.b16 %v808
        %v1065 = vunpack.c.l.b16 %v809
        %v1066 = vunpack.c.l.b16 %v810
        %v1067 = vunpack.c.l.b16 %v811
        %v1068 = vunpack.c.l.b16 %v812
        %v1069 = vunpack.c.l.b16 %v813
        %v1070 = vunpack.c.l.b16 %v814
        %v1071 = vunpack.c.l.b16 %v815
        %v1072 = vunpack.c.l.b16 %v816
        %v1073 = vunpack.c.l.b16 %v817
        %v1074 = vunpack.c.l.b16 %v818
        %v1075 = vunpack.c.l.b16 %v819
        %v1076 = vunpack.c.l.b16 %v820
        %v1077 = vunpack.c.l.b16 %v821
        %v1078 = vunpack.c.l.b16 %v822
        %v1079 = vunpack.c.l.b16 %v823
        %v1080 = vunpack.c.l.b16 %v824
        %v1081 = vunpack.c.l.b16 %v825
        %v1082 = vunpack.c.l.b16 %v826
        %v1083 = vunpack.c.l.b16 %v827
        %v1084 = vunpack.c.l.b16 %v828
        %v1085 = vunpack.c.l.b16 %v829
        %v1086 = vunpack.c.l.b16 %v830
        %v1087 = vunpack.c.l.b16 %v831
        %v1088 = vunpack.c.l.b16 %v832
        %v1089 = vunpack.c.l.b16 %v833
        %v1090 = vunpack.c.l.b16 %v834
        %v1091 = vunpack.c.l.b16 %v835
        %v1092 = vunpack.c.l.b16 %v836
        %v1093 = vunpack.c.l.b16 %v837
        %v1094 = vunpack.c.l.b16 %v838
        %v1095 = vunpack.c.l.b16 %v839
        %v1096 = vunpack.c.l.b16 %v840
        %v1097 = vunpack.c.l.b16 %v841
        %v1098 = vunpack.c.l.b16 %v842
        %v1099 = vunpack.c.l.b16 %v843
        %v1100 = vunpack.c.l.b16 %v844
        %v1101 = vunpack.c.l.b16 %v845
        %v1102 = vunpack.c.l.b16 %v846
        %v1103 = vunpack.c.l.b16 %v847
        %v1104 = vunpack.c.l.b16 %v848
        %v1105 = vunpack.c.l.b16 %v849
        %v1106 = vunpack.c.l.b16 %v850
        %v1107 = vunpack.c.l.b16 %v851
        %v1108 = vunpack.c.l.b16 %v852
        %v1109 = vunpack.c.l.b16 %v853
        %v1110 = vunpack.c.l.b16 %v854
        %v1111 = vunpack.c.l.b16 %v855
        %v1112 = vunpack.c.l.b16 %v856
        %v1113 = vunpack.c.l.b16 %v857
        %v1114 = vunpack.c.l.b16 %v858
        %v1115 = vunpack.c.l.b16 %v859
        %v1116 = vunpack.c.l.b16 %v860
        %v1117 = vunpack.c.l.b16 %v861
        %v1118 = vunpack.c.l.b16 %v862
        %v1119 = vunpack.c.l.b16 %v863
        %v1120 = vunpack.c.l.b16 %v864
        %v1121 = vunpack.c.l.b16 %v865
        %v1122 = vunpack.c.l.b16 %v866
        %v1123 = vunpack.c.l.b16 %v867
        %v1124 = vunpack.c.l.b16 %v868
        %v1125 = vunpack.c.l.b16 %v869
        %v1126 = vunpack.c.l.b16 %v870
        %v1127 = vunpack.c.l.b16 %v871
        %v1128 = vunpack.c.l.b16 %v872
        %v1129 = vunpack.c.l.b16 %v873
        %v1130 = vunpack.c.l.b16 %v874
        %v1131 = vunpack.c.l.b16 %v875
        %v1132 = vunpack.c.l.b16 %v876
        %v1133 = vunpack.c.l.b16 %v877
        %v1134 = vunpack.c.l.b16 %v878
        %v1135 = vunpack.c.l.b16 %v879
        %v1136 = vunpack.c.l.b16 %v880
        %v1137 = vunpack.c.l.b16 %v881
        %v1138 = vunpack.c.l.b16 %v882
        %v1139 = vunpack.c.l.b16 %v883
        %v1140 = vunpack.c.l.b16 %v884
        %v1141 = vunpack.c.l.b16 %v885
        %v1142 = vpack.c.b16 %v1015, %v1014
        %v1143 = vpack.c.b16 %v1017, %v1016
        %v1144 = vpack.c.b16 %v1019, %v1018
        %v1145 = vpack.c.b16 %v1021, %v1020
        %v1146 = vpack.c.b16 %v1023, %v1022
        %v1147 = vpack.c.b16 %v1025, %v1024
        %v1148 = vpack.c.b16 %v1027, %v1026
        %v1149 = vpack.c.b16 %v1029, %v1028
        %v1150 = vpack.c.b16 %v1031, %v1030
        %v1151 = vpack.c.b16 %v1033, %v1032
        %v1152 = vpack.c.b16 %v1035, %v1034
        %v1153 = vpack.c.b16 %v1037, %v1036
        %v1154 = vpack.c.b16 %v1039, %v1038
        %v1155 = vpack.c.b16 %v1041, %v1040
        %v1156 = vpack.c.b16 %v1043, %v1042
        %v1157 = vpack.c.b16 %v1045, %v1044
        %v1158 = vpack.c.b16 %v1047, %v1046
        %v1159 = vpack.c.b16 %v1049, %v1048
        %v1160 = vpack.c.b16 %v1051, %v1050
        %v1161 = vpack.c.b16 %v1053, %v1052
        %v1162 = vpack.c.b16 %v1055, %v1054
        %v1163 = vpack.c.b16 %v1057, %v1056
        %v1164 = vpack.c.b16 %v1059, %v1058
        %v1165 = vpack.c.b16 %v1061, %v1060
        %v1166 = vpack.c.b16 %v1063, %v1062
        %v1167 = vpack.c.b16 %v1065, %v1064
        %v1168 = vpack.c.b16 %v1067, %v1066
        %v1169 = vpack.c.b16 %v1069, %v1068
        %v1170 = vpack.c.b16 %v1071, %v1070
        %v1171 = vpack.c.b16 %v1073, %v1072
        %v1172 = vpack.c.b16 %v1075, %v1074
        %v1173 = vpack.c.b16 %v1077, %v1076
        %v1174 = vpack.c.b16 %v1079, %v1078
        %v1175 = vpack.c.b16 %v1081, %v1080
        %v1176 = vpack.c.b16 %v1083, %v1082
        %v1177 = vpack.c.b16 %v1085, %v1084
        %v1178 = vpack.c.b16 %v1087, %v1086
        %v1179 = vpack.c.b16 %v1089, %v1088
        %v1180 = vpack.c.b16 %v1091, %v1090
        %v1181 = vpack.c.b16 %v1093, %v1092
        %v1182 = vpack.c.b16 %v1095, %v1094
        %v1183 = vpack.c.b16 %v1097, %v1096
        %v1184 = vpack.c.b16 %v1099, %v1098
        %v1185 = vpack.c.b16 %v1101, %v1100
        %v1186 = vpack.c.b16 %v1103, %v1102
        %v1187 = vpack.c.b16 %v1105, %v1104
        %v1188 = vpack.c.b16 %v1107, %v1106
        %v1189 = vpack.c.b16 %v1109, %v1108
        %v1190 = vpack.c.b16 %v1111, %v1110
        %v1191 = vpack.c.b16 %v1113, %v1112
        %v1192 = vpack.c.b16 %v1115, %v1114
        %v1193 = vpack.c.b16 %v1117, %v1116
        %v1194 = vpack.c.b16 %v1119, %v1118
        %v1195 = vpack.c.b16 %v1121, %v1120
        %v1196 = vpack.c.b16 %v1123, %v1122
        %v1197 = vpack.c.b16 %v1125, %v1124
        %v1198 = vpack.c.b16 %v1127, %v1126
        %v1199 = vpack.c.b16 %v1129, %v1128
        %v1200 = vpack.c.b16 %v1131, %v1130
        %v1201 = vpack.c.b16 %v1133, %v1132
        %v1202 = vpack.c.b16 %v1135, %v1134
        %v1203 = vpack.c.b16 %v1137, %v1136
        %v1204 = vpack.c.b16 %v1139, %v1138
        %v1205 = vpack.c.b16 %v1141, %v1140
        %1270 = vmatprep.subr.bf16.mxu0 0
        %1271 = vmatpush1.bf16.msra.mxu0 %v1149
        %1272 = vmatprep.subr.bf16.mxu0 0
        %1273 = vmatpush1.bf16.msra.mxu0 %v1148
        %1274 = vmatprep.subr.bf16.mxu0 0
        %1275 = vmatpush1.bf16.msra.mxu0 %v1147
        %1276 = vmatprep.subr.bf16.mxu0 0
        %1277 = vmatpush1.bf16.msra.mxu0 %v1146
        %1278 = vmatprep.subr.bf16.mxu0 0
        %1279 = vmatpush1.bf16.msra.mxu0 %v1145
        %1280 = vmatprep.subr.bf16.mxu0 0
        %1281 = vmatpush1.bf16.msra.mxu0 %v1144
        %1282 = vmatprep.subr.bf16.mxu0 0
        %1283 = vmatpush1.bf16.msra.mxu0 %v1143
        %1284 = vmatprep.subr.bf16.mxu0 0
        %1285 = vmatpush1.bf16.msra.mxu0 %v1142
        %1286 = vmatprep.subr.bf16.mxu0 0
        %1287 = vmatpush2.bf16.msra.mxu0 %v1157
        %1288 = vmatprep.subr.bf16.mxu0 0
        %1289 = vmatpush2.bf16.msra.mxu0 %v1156
        %1290 = vmatprep.subr.bf16.mxu0 0
        %1291 = vmatpush2.bf16.msra.mxu0 %v1155
        %1292 = vmatprep.subr.bf16.mxu0 0
        %1293 = vmatpush2.bf16.msra.mxu0 %v1154
        %1294 = vmatprep.subr.bf16.mxu0 0
        %1295 = vmatpush2.bf16.msra.mxu0 %v1153
        %1296 = vmatprep.subr.bf16.mxu0 0
        %1297 = vmatpush2.bf16.msra.mxu0 %v1152
        %1298 = vmatprep.subr.bf16.mxu0 0
        %1299 = vmatpush2.bf16.msra.mxu0 %v1151
        %1300 = vmatprep.subr.bf16.mxu0 0
        %1301 = vmatpush2.bf16.msra.mxu0 %v1150
        %1302 = vmatprep.mubr.bf16.mxu0 %v672
        %1303 = vmatmul.mubr.bf16.gmra.mxu0 %v656
        %v1304 = vpop.f32.mrf.mxu0
        %v1305 = vadd.f32 0.0, %v1304
        %v1306 = vpop.f32.mrf.mxu0
        %v1307 = vpop.f32.mrf.mxu0
        %v1308 = vadd.f32 0.0, %v1307
        %v1309 = vpop.f32.mrf.mxu0
        %1310 = vdwg.mxu0
        %1311 = vmatprep.subr.bf16.mxu0 0
        %1312 = vmatpush1.bf16.msra.mxu0 %v1165
        %1313 = vmatprep.subr.bf16.mxu0 0
        %1314 = vmatpush1.bf16.msra.mxu0 %v1164
        %1315 = vmatprep.subr.bf16.mxu0 0
        %1316 = vmatpush1.bf16.msra.mxu0 %v1163
        %1317 = vmatprep.subr.bf16.mxu0 0
        %1318 = vmatpush1.bf16.msra.mxu0 %v1162
        %1319 = vmatprep.subr.bf16.mxu0 0
        %1320 = vmatpush1.bf16.msra.mxu0 %v1161
        %1321 = vmatprep.subr.bf16.mxu0 0
        %1322 = vmatpush1.bf16.msra.mxu0 %v1160
        %1323 = vmatprep.subr.bf16.mxu0 0
        %1324 = vmatpush1.bf16.msra.mxu0 %v1159
        %1325 = vmatprep.subr.bf16.mxu0 0
        %1326 = vmatpush1.bf16.msra.mxu0 %v1158
        %1327 = vmatprep.subr.bf16.mxu0 0
        %1328 = vmatpush2.bf16.msra.mxu0 %v1173
        %1329 = vmatprep.subr.bf16.mxu0 0
        %1330 = vmatpush2.bf16.msra.mxu0 %v1172
        %1331 = vmatprep.subr.bf16.mxu0 0
        %1332 = vmatpush2.bf16.msra.mxu0 %v1171
        %1333 = vmatprep.subr.bf16.mxu0 0
        %1334 = vmatpush2.bf16.msra.mxu0 %v1170
        %1335 = vmatprep.subr.bf16.mxu0 0
        %1336 = vmatpush2.bf16.msra.mxu0 %v1169
        %1337 = vmatprep.subr.bf16.mxu0 0
        %1338 = vmatpush2.bf16.msra.mxu0 %v1168
        %1339 = vmatprep.subr.bf16.mxu0 0
        %1340 = vmatpush2.bf16.msra.mxu0 %v1167
        %1341 = vmatprep.subr.bf16.mxu0 0
        %1342 = vmatpush2.bf16.msra.mxu0 %v1166
        %1343 = vmatprep.mubr.bf16.mxu0 %v700
        %1344 = vmatmul.mubr.bf16.gmra.mxu0 %v679
        %v1345 = vpop.f32.mrf.mxu0
        %v1346 = vadd.f32 %v1305, %v1345
        %v1347 = vpop.f32.mrf.mxu0
        %v1348 = vpop.f32.mrf.mxu0
        %v1349 = vadd.f32 %v1308, %v1348
        %v1350 = vpop.f32.mrf.mxu0
        %1351 = vdwg.mxu0
        %1352 = vmatprep.subr.bf16.mxu0 0
        %1353 = vmatpush1.bf16.msra.mxu0 %v1181
        %1354 = vmatprep.subr.bf16.mxu0 0
        %1355 = vmatpush1.bf16.msra.mxu0 %v1180
        %1356 = vmatprep.subr.bf16.mxu0 0
        %1357 = vmatpush1.bf16.msra.mxu0 %v1179
        %1358 = vmatprep.subr.bf16.mxu0 0
        %1359 = vmatpush1.bf16.msra.mxu0 %v1178
        %1360 = vmatprep.subr.bf16.mxu0 0
        %1361 = vmatpush1.bf16.msra.mxu0 %v1177
        %1362 = vmatprep.subr.bf16.mxu0 0
        %1363 = vmatpush1.bf16.msra.mxu0 %v1176
        %1364 = vmatprep.subr.bf16.mxu0 0
        %1365 = vmatpush1.bf16.msra.mxu0 %v1175
        %1366 = vmatprep.subr.bf16.mxu0 0
        %1367 = vmatpush1.bf16.msra.mxu0 %v1174
        %1368 = vmatprep.subr.bf16.mxu0 0
        %1369 = vmatpush2.bf16.msra.mxu0 %v1189
        %1370 = vmatprep.subr.bf16.mxu0 0
        %1371 = vmatpush2.bf16.msra.mxu0 %v1188
        %1372 = vmatprep.subr.bf16.mxu0 0
        %1373 = vmatpush2.bf16.msra.mxu0 %v1187
        %1374 = vmatprep.subr.bf16.mxu0 0
        %1375 = vmatpush2.bf16.msra.mxu0 %v1186
        %1376 = vmatprep.subr.bf16.mxu0 0
        %1377 = vmatpush2.bf16.msra.mxu0 %v1185
        %1378 = vmatprep.subr.bf16.mxu0 0
        %1379 = vmatpush2.bf16.msra.mxu0 %v1184
        %1380 = vmatprep.subr.bf16.mxu0 0
        %1381 = vmatpush2.bf16.msra.mxu0 %v1183
        %1382 = vmatprep.subr.bf16.mxu0 0
        %1383 = vmatpush2.bf16.msra.mxu0 %v1182
        %1384 = vmatprep.mubr.bf16.mxu0 %v728
        %1385 = vmatmul.mubr.bf16.gmra.mxu0 %v707
        %v1386 = vpop.f32.mrf.mxu0
        %v1387 = vadd.f32 %v1346, %v1386
        %v1388 = vpop.f32.mrf.mxu0
        %v1389 = vpop.f32.mrf.mxu0
        %v1390 = vadd.f32 %v1349, %v1389
        %v1391 = vpop.f32.mrf.mxu0
        %1392 = vdwg.mxu0
        %1393 = vmatprep.subr.bf16.mxu0 0
        %1394 = vmatpush1.bf16.msra.mxu0 %v1197
        %1395 = vmatprep.subr.bf16.mxu0 0
        %1396 = vmatpush1.bf16.msra.mxu0 %v1196
        %1397 = vmatprep.subr.bf16.mxu0 0
        %1398 = vmatpush1.bf16.msra.mxu0 %v1195
        %1399 = vmatprep.subr.bf16.mxu0 0
        %1400 = vmatpush1.bf16.msra.mxu0 %v1194
        %1401 = vmatprep.subr.bf16.mxu0 0
        %1402 = vmatpush1.bf16.msra.mxu0 %v1193
        %1403 = vmatprep.subr.bf16.mxu0 0
        %1404 = vmatpush1.bf16.msra.mxu0 %v1192
        %1405 = vmatprep.subr.bf16.mxu0 0
        %1406 = vmatpush1.bf16.msra.mxu0 %v1191
        %1407 = vmatprep.subr.bf16.mxu0 0
        %1408 = vmatpush1.bf16.msra.mxu0 %v1190
        %1409 = vmatprep.subr.bf16.mxu0 0
        %1410 = vmatpush2.bf16.msra.mxu0 %v1205
        %1411 = vmatprep.subr.bf16.mxu0 0
        %1412 = vmatpush2.bf16.msra.mxu0 %v1204
        %1413 = vmatprep.subr.bf16.mxu0 0
        %1414 = vmatpush2.bf16.msra.mxu0 %v1203
        %1415 = vmatprep.subr.bf16.mxu0 0
        %1416 = vmatpush2.bf16.msra.mxu0 %v1202
        %1417 = vmatprep.subr.bf16.mxu0 0
        %1418 = vmatpush2.bf16.msra.mxu0 %v1201
        %1419 = vmatprep.subr.bf16.mxu0 0
        %1420 = vmatpush2.bf16.msra.mxu0 %v1200
        %1421 = vmatprep.subr.bf16.mxu0 0
        %1422 = vmatpush2.bf16.msra.mxu0 %v1199
        %1423 = vmatprep.subr.bf16.mxu0 0
        %1424 = vmatpush2.bf16.msra.mxu0 %v1198
        %1425 = vmatprep.mubr.bf16.mxu0 %v756
        %1426 = vmatmul.mubr.bf16.gmra.mxu0 %v735
        %v1427 = vpop.f32.mrf.mxu0
        %v1428 = vadd.f32 %v1387, %v1427
        %v1429 = vpop.f32.mrf.mxu0
        %v1430 = vpop.f32.mrf.mxu0
        %v1431 = vadd.f32 %v1390, %v1430
        %v1432 = vpop.f32.mrf.mxu0
        %1433 = vdwg.mxu0
        %1434 = vst [vmem:[#allocation5] sm:$0x1] -inf
        %1435 = vst [vmem:[#allocation5 + $0x1] sm:$0xff] %v1428
        %1436 = vst [vmem:[#allocation5 + $0x9] sm:$0xff] %v1431
        %1437 = vst [vmem:[#allocation5 + $0x11] sm:$0x1] -inf
        %v1438 = vld [vmem:[#allocation5] ss:$2 sm:$0xff]
        %s1439 = scalar_lea.vmem [#allocation5], 16
        %v1440 = vld [vmem:[%s1439] ss:$2 sm:$0x1]
        %s1441 = scalar_lea.vmem [#allocation5], 1
        %v1442 = vld [vmem:[%s1441] ss:$2 sm:$0xff]
        %s1443 = scalar_lea.vmem [#allocation5], 17
        %v1444 = vld [vmem:[%s1443] ss:$2 sm:$0x1]
        %v1445 = vmax.f32 %v1438, %v1442
        %v1446 = vmax.f32 %v1440, %v1444
        %v1447 = vld [vmem:[%s4] sm:$0x1]
        %v1449 = vlaneseq
        %v1450 = vshrl.u32 %v1449, 7
        %v1451 = vsub.s32 0, %v1450
        %v1452 = vrot.slane %v1447, %v1451
        %v1454 = vadd.f32 %v1445, %v1452
        %v1455 = vadd.f32 %v1446, %v1452
        %v1456 = vmax.f32 %v1454, 0.0
        %v1457 = vmax.f32 %v1455, 0.0
        %v1458 = vpack.c.bf16 %v1457, %v1456
        %v1459 = vld [vmem:[#allocation9] sm:$0xf]
        %v1460 = vld [vmem:[#allocation9 + $0x4] sm:$0xf]
        %v1461 = vld [vmem:[#allocation9 + $0x8] sm:$0xf]
        %v1462 = vld [vmem:[#allocation9 + $0xc] sm:$0xf]
        %v1463 = vld [vmem:[#allocation9 + $0x10] sm:$0xf]
        %v1464 = vld [vmem:[#allocation9 + $0x14] sm:$0xf]
        %v1465 = vld [vmem:[#allocation9 + $0x18] sm:$0xf]
        %v1466 = vld [vmem:[#allocation9 + $0x1c] sm:$0xf]
        %v1467 = vld [vmem:[#allocation9 + $0x20] sm:$0xf]
        %v1468 = vld [vmem:[#allocation9 + $0x24] sm:$0xf]
        %v1469 = vld [vmem:[#allocation9 + $0x28] sm:$0xf]
        %v1470 = vld [vmem:[#allocation9 + $0x2c] sm:$0xf]
        %v1471 = vld [vmem:[#allocation9 + $0x30] sm:$0xf]
        %v1472 = vld [vmem:[#allocation9 + $0x34] sm:$0xf]
        %v1473 = vld [vmem:[#allocation9 + $0x38] sm:$0xf]
        %v1474 = vld [vmem:[#allocation9 + $0x3c] sm:$0xf]
        %s1475 = scalar_lea.vmem [#allocation9], 64
        %v1476 = vld [vmem:[%s1475] sm:$0xf]
        %v1477 = vld [vmem:[%s1475 + $0x4] sm:$0xf]
        %v1478 = vld [vmem:[%s1475 + $0x8] sm:$0xf]
        %v1479 = vld [vmem:[%s1475 + $0xc] sm:$0xf]
        %v1480 = vld [vmem:[%s1475 + $0x10] sm:$0xf]
        %v1481 = vld [vmem:[%s1475 + $0x14] sm:$0xf]
        %v1482 = vld [vmem:[%s1475 + $0x18] sm:$0xf]
        %v1483 = vld [vmem:[%s1475 + $0x1c] sm:$0xf]
        %v1484 = vld [vmem:[%s1475 + $0x20] sm:$0xf]
        %v1485 = vld [vmem:[%s1475 + $0x24] sm:$0xf]
        %v1486 = vld [vmem:[%s1475 + $0x28] sm:$0xf]
        %v1487 = vld [vmem:[%s1475 + $0x2c] sm:$0xf]
        %v1488 = vld [vmem:[%s1475 + $0x30] sm:$0xf]
        %v1489 = vld [vmem:[%s1475 + $0x34] sm:$0xf]
        %v1490 = vld [vmem:[%s1475 + $0x38] sm:$0xf]
        %v1491 = vld [vmem:[%s1475 + $0x3c] sm:$0xf]
        %v1493 = vshrl.u32 %v1458, 16
        %v1512 = vunpack.c.l.b16 %v1476
        %v1513 = vunpack.c.l.b16 %v1477
        %v1514 = vunpack.c.l.b16 %v1478
        %v1515 = vunpack.c.l.b16 %v1479
        %v1516 = vunpack.c.l.b16 %v1480
        %v1517 = vunpack.c.l.b16 %v1481
        %v1518 = vunpack.c.l.b16 %v1482
        %v1519 = vunpack.c.l.b16 %v1483
        %v1520 = vunpack.c.l.b16 %v1484
        %v1521 = vunpack.c.l.b16 %v1485
        %v1522 = vunpack.c.l.b16 %v1486
        %v1523 = vunpack.c.l.b16 %v1487
        %v1524 = vunpack.c.l.b16 %v1488
        %v1525 = vunpack.c.l.b16 %v1489
        %v1526 = vunpack.c.l.b16 %v1490
        %v1527 = vunpack.c.l.b16 %v1491
        %v1528 = vpack.c.b16 %v1513, %v1512
        %v1529 = vpack.c.b16 %v1515, %v1514
        %v1530 = vpack.c.b16 %v1517, %v1516
        %v1531 = vpack.c.b16 %v1519, %v1518
        %v1532 = vpack.c.b16 %v1521, %v1520
        %v1533 = vpack.c.b16 %v1523, %v1522
        %v1534 = vpack.c.b16 %v1525, %v1524
        %v1535 = vpack.c.b16 %v1527, %v1526
        %1544 = vmatprep.subr.bf16.mxu0 0
        %1545 = vmatpush1.bf16.msra.mxu0 %v1535
        %1546 = vmatprep.subr.bf16.mxu0 0
        %1547 = vmatpush1.bf16.msra.mxu0 %v1534
        %1548 = vmatprep.subr.bf16.mxu0 0
        %1549 = vmatpush1.bf16.msra.mxu0 %v1533
        %1550 = vmatprep.subr.bf16.mxu0 0
        %1551 = vmatpush1.bf16.msra.mxu0 %v1532
        %1552 = vmatprep.subr.bf16.mxu0 0
        %1553 = vmatpush1.bf16.msra.mxu0 %v1531
        %1554 = vmatprep.subr.bf16.mxu0 0
        %1555 = vmatpush1.bf16.msra.mxu0 %v1530
        %1556 = vmatprep.subr.bf16.mxu0 0
        %1557 = vmatpush1.bf16.msra.mxu0 %v1529
        %1558 = vmatprep.subr.bf16.mxu0 0
        %1559 = vmatpush1.bf16.msra.mxu0 %v1528
        %1560 = vmatprep.subr.bf16.mxu0 0
        %1561 = vmatpush2.bf16.msra.mxu0 0
        %1562 = vmatprep.subr.bf16.mxu0 0
        %1563 = vmatpush2.bf16.msra.mxu0 0
        %1564 = vmatprep.subr.bf16.mxu0 0
        %1565 = vmatpush2.bf16.msra.mxu0 0
        %1566 = vmatprep.subr.bf16.mxu0 0
        %1567 = vmatpush2.bf16.msra.mxu0 0
        %1568 = vmatprep.subr.bf16.mxu0 0
        %1569 = vmatpush2.bf16.msra.mxu0 0
        %1570 = vmatprep.subr.bf16.mxu0 0
        %1571 = vmatpush2.bf16.msra.mxu0 0
        %1572 = vmatprep.subr.bf16.mxu0 0
        %1573 = vmatpush2.bf16.msra.mxu0 0
        %1574 = vmatprep.subr.bf16.mxu0 0
        %1575 = vmatpush2.bf16.msra.mxu0 0
        %1576 = vmatprep.mubr.bf16.mxu0 0
        %1577 = vmatmul.mubr.bf16.gmra.mxu0 %v1493
        %v1578 = vpop.f32.mrf.mxu0
        %v1579 = vadd.f32 0.0, %v1578
        %v1580 = vpop.f32.mrf.mxu0
        %v1581 = vpop.f32.mrf.mxu0
        %v1582 = vpop.f32.mrf.mxu0
        %1583 = vdwg.mxu0
        %v1600 = vunpack.c.l.b16 %v1459
        %v1601 = vunpack.c.l.b16 %v1460
        %v1602 = vunpack.c.l.b16 %v1461
        %v1603 = vunpack.c.l.b16 %v1462
        %v1604 = vunpack.c.l.b16 %v1463
        %v1605 = vunpack.c.l.b16 %v1464
        %v1606 = vunpack.c.l.b16 %v1465
        %v1607 = vunpack.c.l.b16 %v1466
        %v1608 = vunpack.c.l.b16 %v1467
        %v1609 = vunpack.c.l.b16 %v1468
        %v1610 = vunpack.c.l.b16 %v1469
        %v1611 = vunpack.c.l.b16 %v1470
        %v1612 = vunpack.c.l.b16 %v1471
        %v1613 = vunpack.c.l.b16 %v1472
        %v1614 = vunpack.c.l.b16 %v1473
        %v1615 = vunpack.c.l.b16 %v1474
        %v1616 = vpack.c.b16 %v1601, %v1600
        %v1617 = vpack.c.b16 %v1603, %v1602
        %v1618 = vpack.c.b16 %v1605, %v1604
        %v1619 = vpack.c.b16 %v1607, %v1606
        %v1620 = vpack.c.b16 %v1609, %v1608
        %v1621 = vpack.c.b16 %v1611, %v1610
        %v1622 = vpack.c.b16 %v1613, %v1612
        %v1623 = vpack.c.b16 %v1615, %v1614
        %1632 = vmatprep.subr.bf16.mxu0 0
        %1633 = vmatpush1.bf16.msra.mxu0 %v1623
        %1634 = vmatprep.subr.bf16.mxu0 0
        %1635 = vmatpush1.bf16.msra.mxu0 %v1622
        %1636 = vmatprep.subr.bf16.mxu0 0
        %1637 = vmatpush1.bf16.msra.mxu0 %v1621
        %1638 = vmatprep.subr.bf16.mxu0 0
        %1639 = vmatpush1.bf16.msra.mxu0 %v1620
        %1640 = vmatprep.subr.bf16.mxu0 0
        %1641 = vmatpush1.bf16.msra.mxu0 %v1619
        %1642 = vmatprep.subr.bf16.mxu0 0
        %1643 = vmatpush1.bf16.msra.mxu0 %v1618
        %1644 = vmatprep.subr.bf16.mxu0 0
        %1645 = vmatpush1.bf16.msra.mxu0 %v1617
        %1646 = vmatprep.subr.bf16.mxu0 0
        %1647 = vmatpush1.bf16.msra.mxu0 %v1616
        %1648 = vmatprep.subr.bf16.mxu0 0
        %1649 = vmatpush2.bf16.msra.mxu0 0
        %1650 = vmatprep.subr.bf16.mxu0 0
        %1651 = vmatpush2.bf16.msra.mxu0 0
        %1652 = vmatprep.subr.bf16.mxu0 0
        %1653 = vmatpush2.bf16.msra.mxu0 0
        %1654 = vmatprep.subr.bf16.mxu0 0
        %1655 = vmatpush2.bf16.msra.mxu0 0
        %1656 = vmatprep.subr.bf16.mxu0 0
        %1657 = vmatpush2.bf16.msra.mxu0 0
        %1658 = vmatprep.subr.bf16.mxu0 0
        %1659 = vmatpush2.bf16.msra.mxu0 0
        %1660 = vmatprep.subr.bf16.mxu0 0
        %1661 = vmatpush2.bf16.msra.mxu0 0
        %1662 = vmatprep.subr.bf16.mxu0 0
        %1663 = vmatpush2.bf16.msra.mxu0 0
        %1664 = vmatprep.mubr.bf16.mxu0 0
        %1665 = vmatmul.mubr.bf16.gmra.mxu0 %v1458
        %v1666 = vpop.f32.mrf.mxu0
        %v1667 = vadd.f32 %v1579, %v1666
        %v1668 = vpop.f32.mrf.mxu0
        %v1669 = vpop.f32.mrf.mxu0
        %v1670 = vpop.f32.mrf.mxu0
        %1671 = vdwg.mxu0
        %s1672 = scalar_lea.vmem [#allocation9], 128
        %v1673 = vld [vmem:[%s1672] sm:$0xf]
        %v1674 = vld [vmem:[%s1672 + $0x4] sm:$0xf]
        %v1675 = vld [vmem:[%s1672 + $0x8] sm:$0xf]
        %v1676 = vld [vmem:[%s1672 + $0xc] sm:$0xf]
        %v1677 = vld [vmem:[%s1672 + $0x10] sm:$0xf]
        %v1678 = vld [vmem:[%s1672 + $0x14] sm:$0xf]
        %v1679 = vld [vmem:[%s1672 + $0x18] sm:$0xf]
        %v1680 = vld [vmem:[%s1672 + $0x1c] sm:$0xf]
        %v1681 = vld [vmem:[%s1672 + $0x20] sm:$0xf]
        %v1682 = vld [vmem:[%s1672 + $0x24] sm:$0xf]
        %v1683 = vld [vmem:[%s1672 + $0x28] sm:$0xf]
        %v1684 = vld [vmem:[%s1672 + $0x2c] sm:$0xf]
        %v1685 = vld [vmem:[%s1672 + $0x30] sm:$0xf]
        %v1686 = vld [vmem:[%s1672 + $0x34] sm:$0xf]
        %v1687 = vld [vmem:[%s1672 + $0x38] sm:$0xf]
        %v1688 = vld [vmem:[%s1672 + $0x3c] sm:$0xf]
        %v1690 = vrot.slane %v1458, 1
        %v1708 = vunpack.c.l.b16 %v1673
        %v1709 = vunpack.c.l.b16 %v1674
        %v1710 = vunpack.c.l.b16 %v1675
        %v1711 = vunpack.c.l.b16 %v1676
        %v1712 = vunpack.c.l.b16 %v1677
        %v1713 = vunpack.c.l.b16 %v1678
        %v1714 = vunpack.c.l.b16 %v1679
        %v1715 = vunpack.c.l.b16 %v1680
        %v1716 = vunpack.c.l.b16 %v1681
        %v1717 = vunpack.c.l.b16 %v1682
        %v1718 = vunpack.c.l.b16 %v1683
        %v1719 = vunpack.c.l.b16 %v1684
        %v1720 = vunpack.c.l.b16 %v1685
        %v1721 = vunpack.c.l.b16 %v1686
        %v1722 = vunpack.c.l.b16 %v1687
        %v1723 = vunpack.c.l.b16 %v1688
        %v1724 = vpack.c.b16 %v1709, %v1708
        %v1725 = vpack.c.b16 %v1711, %v1710
        %v1726 = vpack.c.b16 %v1713, %v1712
        %v1727 = vpack.c.b16 %v1715, %v1714
        %v1728 = vpack.c.b16 %v1717, %v1716
        %v1729 = vpack.c.b16 %v1719, %v1718
        %v1730 = vpack.c.b16 %v1721, %v1720
        %v1731 = vpack.c.b16 %v1723, %v1722
        %1740 = vmatprep.subr.bf16.mxu0 0
        %1741 = vmatpush1.bf16.msra.mxu0 %v1731
        %1742 = vmatprep.subr.bf16.mxu0 0
        %1743 = vmatpush1.bf16.msra.mxu0 %v1730
        %1744 = vmatprep.subr.bf16.mxu0 0
        %1745 = vmatpush1.bf16.msra.mxu0 %v1729
        %1746 = vmatprep.subr.bf16.mxu0 0
        %1747 = vmatpush1.bf16.msra.mxu0 %v1728
        %1748 = vmatprep.subr.bf16.mxu0 0
        %1749 = vmatpush1.bf16.msra.mxu0 %v1727
        %1750 = vmatprep.subr.bf16.mxu0 0
        %1751 = vmatpush1.bf16.msra.mxu0 %v1726
        %1752 = vmatprep.subr.bf16.mxu0 0
        %1753 = vmatpush1.bf16.msra.mxu0 %v1725
        %1754 = vmatprep.subr.bf16.mxu0 0
        %1755 = vmatpush1.bf16.msra.mxu0 %v1724
        %1756 = vmatprep.subr.bf16.mxu0 0
        %1757 = vmatpush2.bf16.msra.mxu0 0
        %1758 = vmatprep.subr.bf16.mxu0 0
        %1759 = vmatpush2.bf16.msra.mxu0 0
        %1760 = vmatprep.subr.bf16.mxu0 0
        %1761 = vmatpush2.bf16.msra.mxu0 0
        %1762 = vmatprep.subr.bf16.mxu0 0
        %1763 = vmatpush2.bf16.msra.mxu0 0
        %1764 = vmatprep.subr.bf16.mxu0 0
        %1765 = vmatpush2.bf16.msra.mxu0 0
        %1766 = vmatprep.subr.bf16.mxu0 0
        %1767 = vmatpush2.bf16.msra.mxu0 0
        %1768 = vmatprep.subr.bf16.mxu0 0
        %1769 = vmatpush2.bf16.msra.mxu0 0
        %1770 = vmatprep.subr.bf16.mxu0 0
        %1771 = vmatpush2.bf16.msra.mxu0 0
        %1772 = vmatprep.mubr.bf16.mxu0 0
        %1773 = vmatmul.mubr.bf16.gmra.mxu0 %v1690
        %v1774 = vpop.f32.mrf.mxu0
        %v1775 = vadd.f32 0.0, %v1774
        %v1776 = vpop.f32.mrf.mxu0
        %v1777 = vpop.f32.mrf.mxu0
        %v1778 = vpop.f32.mrf.mxu0
        %1779 = vdwg.mxu0
        %v1780 = vadd.f32 %v1667, %v1775
        %s1781 = scalar_lea.vmem [#allocation9], 192
        %v1782 = vld [vmem:[%s1781] sm:$0xf]
        %v1783 = vld [vmem:[%s1781 + $0x4] sm:$0xf]
        %v1784 = vld [vmem:[%s1781 + $0x8] sm:$0xf]
        %v1785 = vld [vmem:[%s1781 + $0xc] sm:$0xf]
        %v1786 = vld [vmem:[%s1781 + $0x10] sm:$0xf]
        %v1787 = vld [vmem:[%s1781 + $0x14] sm:$0xf]
        %v1788 = vld [vmem:[%s1781 + $0x18] sm:$0xf]
        %v1789 = vld [vmem:[%s1781 + $0x1c] sm:$0xf]
        %v1790 = vld [vmem:[%s1781 + $0x20] sm:$0xf]
        %v1791 = vld [vmem:[%s1781 + $0x24] sm:$0xf]
        %v1792 = vld [vmem:[%s1781 + $0x28] sm:$0xf]
        %v1793 = vld [vmem:[%s1781 + $0x2c] sm:$0xf]
        %v1794 = vld [vmem:[%s1781 + $0x30] sm:$0xf]
        %v1795 = vld [vmem:[%s1781 + $0x34] sm:$0xf]
        %v1796 = vld [vmem:[%s1781 + $0x38] sm:$0xf]
        %v1797 = vld [vmem:[%s1781 + $0x3c] sm:$0xf]
        %v1798 = vrot.slane %v1493, 1
        %v1816 = vunpack.c.l.b16 %v1782
        %v1817 = vunpack.c.l.b16 %v1783
        %v1818 = vunpack.c.l.b16 %v1784
        %v1819 = vunpack.c.l.b16 %v1785
        %v1820 = vunpack.c.l.b16 %v1786
        %v1821 = vunpack.c.l.b16 %v1787
        %v1822 = vunpack.c.l.b16 %v1788
        %v1823 = vunpack.c.l.b16 %v1789
        %v1824 = vunpack.c.l.b16 %v1790
        %v1825 = vunpack.c.l.b16 %v1791
        %v1826 = vunpack.c.l.b16 %v1792
        %v1827 = vunpack.c.l.b16 %v1793
        %v1828 = vunpack.c.l.b16 %v1794
        %v1829 = vunpack.c.l.b16 %v1795
        %v1830 = vunpack.c.l.b16 %v1796
        %v1831 = vunpack.c.l.b16 %v1797
        %v1832 = vpack.c.b16 %v1817, %v1816
        %v1833 = vpack.c.b16 %v1819, %v1818
        %v1834 = vpack.c.b16 %v1821, %v1820
        %v1835 = vpack.c.b16 %v1823, %v1822
        %v1836 = vpack.c.b16 %v1825, %v1824
        %v1837 = vpack.c.b16 %v1827, %v1826
        %v1838 = vpack.c.b16 %v1829, %v1828
        %v1839 = vpack.c.b16 %v1831, %v1830
        %1848 = vmatprep.subr.bf16.mxu0 0
        %1849 = vmatpush1.bf16.msra.mxu0 %v1839
        %1850 = vmatprep.subr.bf16.mxu0 0
        %1851 = vmatpush1.bf16.msra.mxu0 %v1838
        %1852 = vmatprep.subr.bf16.mxu0 0
        %1853 = vmatpush1.bf16.msra.mxu0 %v1837
        %1854 = vmatprep.subr.bf16.mxu0 0
        %1855 = vmatpush1.bf16.msra.mxu0 %v1836
        %1856 = vmatprep.subr.bf16.mxu0 0
        %1857 = vmatpush1.bf16.msra.mxu0 %v1835
        %1858 = vmatprep.subr.bf16.mxu0 0
        %1859 = vmatpush1.bf16.msra.mxu0 %v1834
        %1860 = vmatprep.subr.bf16.mxu0 0
        %1861 = vmatpush1.bf16.msra.mxu0 %v1833
        %1862 = vmatprep.subr.bf16.mxu0 0
        %1863 = vmatpush1.bf16.msra.mxu0 %v1832
        %1864 = vmatprep.subr.bf16.mxu0 0
        %1865 = vmatpush2.bf16.msra.mxu0 0
        %1866 = vmatprep.subr.bf16.mxu0 0
        %1867 = vmatpush2.bf16.msra.mxu0 0
        %1868 = vmatprep.subr.bf16.mxu0 0
        %1869 = vmatpush2.bf16.msra.mxu0 0
        %1870 = vmatprep.subr.bf16.mxu0 0
        %1871 = vmatpush2.bf16.msra.mxu0 0
        %1872 = vmatprep.subr.bf16.mxu0 0
        %1873 = vmatpush2.bf16.msra.mxu0 0
        %1874 = vmatprep.subr.bf16.mxu0 0
        %1875 = vmatpush2.bf16.msra.mxu0 0
        %1876 = vmatprep.subr.bf16.mxu0 0
        %1877 = vmatpush2.bf16.msra.mxu0 0
        %1878 = vmatprep.subr.bf16.mxu0 0
        %1879 = vmatpush2.bf16.msra.mxu0 0
        %1880 = vmatprep.mubr.bf16.mxu0 0
        %1881 = vmatmul.mubr.bf16.gmra.mxu0 %v1798
        %v1882 = vpop.f32.mrf.mxu0
        %v1883 = vadd.f32 0.0, %v1882
        %v1884 = vpop.f32.mrf.mxu0
        %v1885 = vpop.f32.mrf.mxu0
        %v1886 = vpop.f32.mrf.mxu0
        %1887 = vdwg.mxu0
        %v1888 = vadd.f32 %v1780, %v1883
        %s1889 = scalar_lea.vmem [#allocation9], 256
        %v1890 = vld [vmem:[%s1889] sm:$0xf]
        %v1891 = vld [vmem:[%s1889 + $0x4] sm:$0xf]
        %v1892 = vld [vmem:[%s1889 + $0x8] sm:$0xf]
        %v1893 = vld [vmem:[%s1889 + $0xc] sm:$0xf]
        %v1894 = vld [vmem:[%s1889 + $0x10] sm:$0xf]
        %v1895 = vld [vmem:[%s1889 + $0x14] sm:$0xf]
        %v1896 = vld [vmem:[%s1889 + $0x18] sm:$0xf]
        %v1897 = vld [vmem:[%s1889 + $0x1c] sm:$0xf]
        %v1898 = vld [vmem:[%s1889 + $0x20] sm:$0xf]
        %v1899 = vld [vmem:[%s1889 + $0x24] sm:$0xf]
        %v1900 = vld [vmem:[%s1889 + $0x28] sm:$0xf]
        %v1901 = vld [vmem:[%s1889 + $0x2c] sm:$0xf]
        %v1902 = vld [vmem:[%s1889 + $0x30] sm:$0xf]
        %v1903 = vld [vmem:[%s1889 + $0x34] sm:$0xf]
        %v1904 = vld [vmem:[%s1889 + $0x38] sm:$0xf]
        %v1905 = vld [vmem:[%s1889 + $0x3c] sm:$0xf]
        %v1906 = vrot.slane %v1458, 2
        %v1924 = vunpack.c.l.b16 %v1890
        %v1925 = vunpack.c.l.b16 %v1891
        %v1926 = vunpack.c.l.b16 %v1892
        %v1927 = vunpack.c.l.b16 %v1893
        %v1928 = vunpack.c.l.b16 %v1894
        %v1929 = vunpack.c.l.b16 %v1895
        %v1930 = vunpack.c.l.b16 %v1896
        %v1931 = vunpack.c.l.b16 %v1897
        %v1932 = vunpack.c.l.b16 %v1898
        %v1933 = vunpack.c.l.b16 %v1899
        %v1934 = vunpack.c.l.b16 %v1900
        %v1935 = vunpack.c.l.b16 %v1901
        %v1936 = vunpack.c.l.b16 %v1902
        %v1937 = vunpack.c.l.b16 %v1903
        %v1938 = vunpack.c.l.b16 %v1904
        %v1939 = vunpack.c.l.b16 %v1905
        %v1940 = vpack.c.b16 %v1925, %v1924
        %v1941 = vpack.c.b16 %v1927, %v1926
        %v1942 = vpack.c.b16 %v1929, %v1928
        %v1943 = vpack.c.b16 %v1931, %v1930
        %v1944 = vpack.c.b16 %v1933, %v1932
        %v1945 = vpack.c.b16 %v1935, %v1934
        %v1946 = vpack.c.b16 %v1937, %v1936
        %v1947 = vpack.c.b16 %v1939, %v1938
        %1956 = vmatprep.subr.bf16.mxu0 0
        %1957 = vmatpush1.bf16.msra.mxu0 %v1947
        %1958 = vmatprep.subr.bf16.mxu0 0
        %1959 = vmatpush1.bf16.msra.mxu0 %v1946
        %1960 = vmatprep.subr.bf16.mxu0 0
        %1961 = vmatpush1.bf16.msra.mxu0 %v1945
        %1962 = vmatprep.subr.bf16.mxu0 0
        %1963 = vmatpush1.bf16.msra.mxu0 %v1944
        %1964 = vmatprep.subr.bf16.mxu0 0
        %1965 = vmatpush1.bf16.msra.mxu0 %v1943
        %1966 = vmatprep.subr.bf16.mxu0 0
        %1967 = vmatpush1.bf16.msra.mxu0 %v1942
        %1968 = vmatprep.subr.bf16.mxu0 0
        %1969 = vmatpush1.bf16.msra.mxu0 %v1941
        %1970 = vmatprep.subr.bf16.mxu0 0
        %1971 = vmatpush1.bf16.msra.mxu0 %v1940
        %1972 = vmatprep.subr.bf16.mxu0 0
        %1973 = vmatpush2.bf16.msra.mxu0 0
        %1974 = vmatprep.subr.bf16.mxu0 0
        %1975 = vmatpush2.bf16.msra.mxu0 0
        %1976 = vmatprep.subr.bf16.mxu0 0
        %1977 = vmatpush2.bf16.msra.mxu0 0
        %1978 = vmatprep.subr.bf16.mxu0 0
        %1979 = vmatpush2.bf16.msra.mxu0 0
        %1980 = vmatprep.subr.bf16.mxu0 0
        %1981 = vmatpush2.bf16.msra.mxu0 0
        %1982 = vmatprep.subr.bf16.mxu0 0
        %1983 = vmatpush2.bf16.msra.mxu0 0
        %1984 = vmatprep.subr.bf16.mxu0 0
        %1985 = vmatpush2.bf16.msra.mxu0 0
        %1986 = vmatprep.subr.bf16.mxu0 0
        %1987 = vmatpush2.bf16.msra.mxu0 0
        %1988 = vmatprep.mubr.bf16.mxu0 0
        %1989 = vmatmul.mubr.bf16.gmra.mxu0 %v1906
        %v1990 = vpop.f32.mrf.mxu0
        %v1991 = vadd.f32 0.0, %v1990
        %v1992 = vpop.f32.mrf.mxu0
        %v1993 = vpop.f32.mrf.mxu0
        %v1994 = vpop.f32.mrf.mxu0
        %1995 = vdwg.mxu0
        %v1996 = vadd.f32 %v1888, %v1991
        %s1997 = scalar_lea.vmem [#allocation9], 320
        %v1998 = vld [vmem:[%s1997] sm:$0xf]
        %v1999 = vld [vmem:[%s1997 + $0x4] sm:$0xf]
        %v2000 = vld [vmem:[%s1997 + $0x8] sm:$0xf]
        %v2001 = vld [vmem:[%s1997 + $0xc] sm:$0xf]
        %v2002 = vld [vmem:[%s1997 + $0x10] sm:$0xf]
        %v2003 = vld [vmem:[%s1997 + $0x14] sm:$0xf]
        %v2004 = vld [vmem:[%s1997 + $0x18] sm:$0xf]
        %v2005 = vld [vmem:[%s1997 + $0x1c] sm:$0xf]
        %v2006 = vld [vmem:[%s1997 + $0x20] sm:$0xf]
        %v2007 = vld [vmem:[%s1997 + $0x24] sm:$0xf]
        %v2008 = vld [vmem:[%s1997 + $0x28] sm:$0xf]
        %v2009 = vld [vmem:[%s1997 + $0x2c] sm:$0xf]
        %v2010 = vld [vmem:[%s1997 + $0x30] sm:$0xf]
        %v2011 = vld [vmem:[%s1997 + $0x34] sm:$0xf]
        %v2012 = vld [vmem:[%s1997 + $0x38] sm:$0xf]
        %v2013 = vld [vmem:[%s1997 + $0x3c] sm:$0xf]
        %v2014 = vrot.slane %v1493, 2
        %v2032 = vunpack.c.l.b16 %v1998
        %v2033 = vunpack.c.l.b16 %v1999
        %v2034 = vunpack.c.l.b16 %v2000
        %v2035 = vunpack.c.l.b16 %v2001
        %v2036 = vunpack.c.l.b16 %v2002
        %v2037 = vunpack.c.l.b16 %v2003
        %v2038 = vunpack.c.l.b16 %v2004
        %v2039 = vunpack.c.l.b16 %v2005
        %v2040 = vunpack.c.l.b16 %v2006
        %v2041 = vunpack.c.l.b16 %v2007
        %v2042 = vunpack.c.l.b16 %v2008
        %v2043 = vunpack.c.l.b16 %v2009
        %v2044 = vunpack.c.l.b16 %v2010
        %v2045 = vunpack.c.l.b16 %v2011
        %v2046 = vunpack.c.l.b16 %v2012
        %v2047 = vunpack.c.l.b16 %v2013
        %v2048 = vpack.c.b16 %v2033, %v2032
        %v2049 = vpack.c.b16 %v2035, %v2034
        %v2050 = vpack.c.b16 %v2037, %v2036
        %v2051 = vpack.c.b16 %v2039, %v2038
        %v2052 = vpack.c.b16 %v2041, %v2040
        %v2053 = vpack.c.b16 %v2043, %v2042
        %v2054 = vpack.c.b16 %v2045, %v2044
        %v2055 = vpack.c.b16 %v2047, %v2046
        %2064 = vmatprep.subr.bf16.mxu0 0
        %2065 = vmatpush1.bf16.msra.mxu0 %v2055
        %2066 = vmatprep.subr.bf16.mxu0 0
        %2067 = vmatpush1.bf16.msra.mxu0 %v2054
        %2068 = vmatprep.subr.bf16.mxu0 0
        %2069 = vmatpush1.bf16.msra.mxu0 %v2053
        %2070 = vmatprep.subr.bf16.mxu0 0
        %2071 = vmatpush1.bf16.msra.mxu0 %v2052
        %2072 = vmatprep.subr.bf16.mxu0 0
        %2073 = vmatpush1.bf16.msra.mxu0 %v2051
        %2074 = vmatprep.subr.bf16.mxu0 0
        %2075 = vmatpush1.bf16.msra.mxu0 %v2050
        %2076 = vmatprep.subr.bf16.mxu0 0
        %2077 = vmatpush1.bf16.msra.mxu0 %v2049
        %2078 = vmatprep.subr.bf16.mxu0 0
        %2079 = vmatpush1.bf16.msra.mxu0 %v2048
        %2080 = vmatprep.subr.bf16.mxu0 0
        %2081 = vmatpush2.bf16.msra.mxu0 0
        %2082 = vmatprep.subr.bf16.mxu0 0
        %2083 = vmatpush2.bf16.msra.mxu0 0
        %2084 = vmatprep.subr.bf16.mxu0 0
        %2085 = vmatpush2.bf16.msra.mxu0 0
        %2086 = vmatprep.subr.bf16.mxu0 0
        %2087 = vmatpush2.bf16.msra.mxu0 0
        %2088 = vmatprep.subr.bf16.mxu0 0
        %2089 = vmatpush2.bf16.msra.mxu0 0
        %2090 = vmatprep.subr.bf16.mxu0 0
        %2091 = vmatpush2.bf16.msra.mxu0 0
        %2092 = vmatprep.subr.bf16.mxu0 0
        %2093 = vmatpush2.bf16.msra.mxu0 0
        %2094 = vmatprep.subr.bf16.mxu0 0
        %2095 = vmatpush2.bf16.msra.mxu0 0
        %2096 = vmatprep.mubr.bf16.mxu0 0
        %2097 = vmatmul.mubr.bf16.gmra.mxu0 %v2014
        %v2098 = vpop.f32.mrf.mxu0
        %v2099 = vadd.f32 0.0, %v2098
        %v2100 = vpop.f32.mrf.mxu0
        %v2101 = vpop.f32.mrf.mxu0
        %v2102 = vpop.f32.mrf.mxu0
        %2103 = vdwg.mxu0
        %v2104 = vadd.f32 %v1996, %v2099
        %s2105 = scalar_lea.vmem [#allocation9], 384
        %v2106 = vld [vmem:[%s2105] sm:$0xf]
        %v2107 = vld [vmem:[%s2105 + $0x4] sm:$0xf]
        %v2108 = vld [vmem:[%s2105 + $0x8] sm:$0xf]
        %v2109 = vld [vmem:[%s2105 + $0xc] sm:$0xf]
        %v2110 = vld [vmem:[%s2105 + $0x10] sm:$0xf]
        %v2111 = vld [vmem:[%s2105 + $0x14] sm:$0xf]
        %v2112 = vld [vmem:[%s2105 + $0x18] sm:$0xf]
        %v2113 = vld [vmem:[%s2105 + $0x1c] sm:$0xf]
        %v2114 = vld [vmem:[%s2105 + $0x20] sm:$0xf]
        %v2115 = vld [vmem:[%s2105 + $0x24] sm:$0xf]
        %v2116 = vld [vmem:[%s2105 + $0x28] sm:$0xf]
        %v2117 = vld [vmem:[%s2105 + $0x2c] sm:$0xf]
        %v2118 = vld [vmem:[%s2105 + $0x30] sm:$0xf]
        %v2119 = vld [vmem:[%s2105 + $0x34] sm:$0xf]
        %v2120 = vld [vmem:[%s2105 + $0x38] sm:$0xf]
        %v2121 = vld [vmem:[%s2105 + $0x3c] sm:$0xf]
        %v2122 = vrot.slane %v1458, 3
        %v2140 = vunpack.c.l.b16 %v2106
        %v2141 = vunpack.c.l.b16 %v2107
        %v2142 = vunpack.c.l.b16 %v2108
        %v2143 = vunpack.c.l.b16 %v2109
        %v2144 = vunpack.c.l.b16 %v2110
        %v2145 = vunpack.c.l.b16 %v2111
        %v2146 = vunpack.c.l.b16 %v2112
        %v2147 = vunpack.c.l.b16 %v2113
        %v2148 = vunpack.c.l.b16 %v2114
        %v2149 = vunpack.c.l.b16 %v2115
        %v2150 = vunpack.c.l.b16 %v2116
        %v2151 = vunpack.c.l.b16 %v2117
        %v2152 = vunpack.c.l.b16 %v2118
        %v2153 = vunpack.c.l.b16 %v2119
        %v2154 = vunpack.c.l.b16 %v2120
        %v2155 = vunpack.c.l.b16 %v2121
        %v2156 = vpack.c.b16 %v2141, %v2140
        %v2157 = vpack.c.b16 %v2143, %v2142
        %v2158 = vpack.c.b16 %v2145, %v2144
        %v2159 = vpack.c.b16 %v2147, %v2146
        %v2160 = vpack.c.b16 %v2149, %v2148
        %v2161 = vpack.c.b16 %v2151, %v2150
        %v2162 = vpack.c.b16 %v2153, %v2152
        %v2163 = vpack.c.b16 %v2155, %v2154
        %2172 = vmatprep.subr.bf16.mxu0 0
        %2173 = vmatpush1.bf16.msra.mxu0 %v2163
        %2174 = vmatprep.subr.bf16.mxu0 0
        %2175 = vmatpush1.bf16.msra.mxu0 %v2162
        %2176 = vmatprep.subr.bf16.mxu0 0
        %2177 = vmatpush1.bf16.msra.mxu0 %v2161
        %2178 = vmatprep.subr.bf16.mxu0 0
        %2179 = vmatpush1.bf16.msra.mxu0 %v2160
        %2180 = vmatprep.subr.bf16.mxu0 0
        %2181 = vmatpush1.bf16.msra.mxu0 %v2159
        %2182 = vmatprep.subr.bf16.mxu0 0
        %2183 = vmatpush1.bf16.msra.mxu0 %v2158
        %2184 = vmatprep.subr.bf16.mxu0 0
        %2185 = vmatpush1.bf16.msra.mxu0 %v2157
        %2186 = vmatprep.subr.bf16.mxu0 0
        %2187 = vmatpush1.bf16.msra.mxu0 %v2156
        %2188 = vmatprep.subr.bf16.mxu0 0
        %2189 = vmatpush2.bf16.msra.mxu0 0
        %2190 = vmatprep.subr.bf16.mxu0 0
        %2191 = vmatpush2.bf16.msra.mxu0 0
        %2192 = vmatprep.subr.bf16.mxu0 0
        %2193 = vmatpush2.bf16.msra.mxu0 0
        %2194 = vmatprep.subr.bf16.mxu0 0
        %2195 = vmatpush2.bf16.msra.mxu0 0
        %2196 = vmatprep.subr.bf16.mxu0 0
        %2197 = vmatpush2.bf16.msra.mxu0 0
        %2198 = vmatprep.subr.bf16.mxu0 0
        %2199 = vmatpush2.bf16.msra.mxu0 0
        %2200 = vmatprep.subr.bf16.mxu0 0
        %2201 = vmatpush2.bf16.msra.mxu0 0
        %2202 = vmatprep.subr.bf16.mxu0 0
        %2203 = vmatpush2.bf16.msra.mxu0 0
        %2204 = vmatprep.mubr.bf16.mxu0 0
        %2205 = vmatmul.mubr.bf16.gmra.mxu0 %v2122
        %v2206 = vpop.f32.mrf.mxu0
        %v2207 = vadd.f32 0.0, %v2206
        %v2208 = vpop.f32.mrf.mxu0
        %v2209 = vpop.f32.mrf.mxu0
        %v2210 = vpop.f32.mrf.mxu0
        %2211 = vdwg.mxu0
        %v2212 = vadd.f32 %v2104, %v2207
        %s2213 = scalar_lea.vmem [#allocation9], 448
        %v2214 = vld [vmem:[%s2213] sm:$0xf]
        %v2215 = vld [vmem:[%s2213 + $0x4] sm:$0xf]
        %v2216 = vld [vmem:[%s2213 + $0x8] sm:$0xf]
        %v2217 = vld [vmem:[%s2213 + $0xc] sm:$0xf]
        %v2218 = vld [vmem:[%s2213 + $0x10] sm:$0xf]
        %v2219 = vld [vmem:[%s2213 + $0x14] sm:$0xf]
        %v2220 = vld [vmem:[%s2213 + $0x18] sm:$0xf]
        %v2221 = vld [vmem:[%s2213 + $0x1c] sm:$0xf]
        %v2222 = vld [vmem:[%s2213 + $0x20] sm:$0xf]
        %v2223 = vld [vmem:[%s2213 + $0x24] sm:$0xf]
        %v2224 = vld [vmem:[%s2213 + $0x28] sm:$0xf]
        %v2225 = vld [vmem:[%s2213 + $0x2c] sm:$0xf]
        %v2226 = vld [vmem:[%s2213 + $0x30] sm:$0xf]
        %v2227 = vld [vmem:[%s2213 + $0x34] sm:$0xf]
        %v2228 = vld [vmem:[%s2213 + $0x38] sm:$0xf]
        %v2229 = vld [vmem:[%s2213 + $0x3c] sm:$0xf]
        %v2230 = vrot.slane %v1493, 3
        %v2248 = vunpack.c.l.b16 %v2214
        %v2249 = vunpack.c.l.b16 %v2215
        %v2250 = vunpack.c.l.b16 %v2216
        %v2251 = vunpack.c.l.b16 %v2217
        %v2252 = vunpack.c.l.b16 %v2218
        %v2253 = vunpack.c.l.b16 %v2219
        %v2254 = vunpack.c.l.b16 %v2220
        %v2255 = vunpack.c.l.b16 %v2221
        %v2256 = vunpack.c.l.b16 %v2222
        %v2257 = vunpack.c.l.b16 %v2223
        %v2258 = vunpack.c.l.b16 %v2224
        %v2259 = vunpack.c.l.b16 %v2225
        %v2260 = vunpack.c.l.b16 %v2226
        %v2261 = vunpack.c.l.b16 %v2227
        %v2262 = vunpack.c.l.b16 %v2228
        %v2263 = vunpack.c.l.b16 %v2229
        %v2264 = vpack.c.b16 %v2249, %v2248
        %v2265 = vpack.c.b16 %v2251, %v2250
        %v2266 = vpack.c.b16 %v2253, %v2252
        %v2267 = vpack.c.b16 %v2255, %v2254
        %v2268 = vpack.c.b16 %v2257, %v2256
        %v2269 = vpack.c.b16 %v2259, %v2258
        %v2270 = vpack.c.b16 %v2261, %v2260
        %v2271 = vpack.c.b16 %v2263, %v2262
        %2280 = vmatprep.subr.bf16.mxu0 0
        %2281 = vmatpush1.bf16.msra.mxu0 %v2271
        %2282 = vmatprep.subr.bf16.mxu0 0
        %2283 = vmatpush1.bf16.msra.mxu0 %v2270
        %2284 = vmatprep.subr.bf16.mxu0 0
        %2285 = vmatpush1.bf16.msra.mxu0 %v2269
        %2286 = vmatprep.subr.bf16.mxu0 0
        %2287 = vmatpush1.bf16.msra.mxu0 %v2268
        %2288 = vmatprep.subr.bf16.mxu0 0
        %2289 = vmatpush1.bf16.msra.mxu0 %v2267
        %2290 = vmatprep.subr.bf16.mxu0 0
        %2291 = vmatpush1.bf16.msra.mxu0 %v2266
        %2292 = vmatprep.subr.bf16.mxu0 0
        %2293 = vmatpush1.bf16.msra.mxu0 %v2265
        %2294 = vmatprep.subr.bf16.mxu0 0
        %2295 = vmatpush1.bf16.msra.mxu0 %v2264
        %2296 = vmatprep.subr.bf16.mxu0 0
        %2297 = vmatpush2.bf16.msra.mxu0 0
        %2298 = vmatprep.subr.bf16.mxu0 0
        %2299 = vmatpush2.bf16.msra.mxu0 0
        %2300 = vmatprep.subr.bf16.mxu0 0
        %2301 = vmatpush2.bf16.msra.mxu0 0
        %2302 = vmatprep.subr.bf16.mxu0 0
        %2303 = vmatpush2.bf16.msra.mxu0 0
        %2304 = vmatprep.subr.bf16.mxu0 0
        %2305 = vmatpush2.bf16.msra.mxu0 0
        %2306 = vmatprep.subr.bf16.mxu0 0
        %2307 = vmatpush2.bf16.msra.mxu0 0
        %2308 = vmatprep.subr.bf16.mxu0 0
        %2309 = vmatpush2.bf16.msra.mxu0 0
        %2310 = vmatprep.subr.bf16.mxu0 0
        %2311 = vmatpush2.bf16.msra.mxu0 0
        %2312 = vmatprep.mubr.bf16.mxu0 0
        %2313 = vmatmul.mubr.bf16.gmra.mxu0 %v2230
        %v2314 = vpop.f32.mrf.mxu0
        %v2315 = vadd.f32 0.0, %v2314
        %v2316 = vpop.f32.mrf.mxu0
        %v2317 = vpop.f32.mrf.mxu0
        %v2318 = vpop.f32.mrf.mxu0
        %2319 = vdwg.mxu0
        %v2320 = vadd.f32 %v2212, %v2315
        %s2321 = scalar_lea.vmem [#allocation9], 512
        %v2322 = vld [vmem:[%s2321] sm:$0xf]
        %v2323 = vld [vmem:[%s2321 + $0x4] sm:$0xf]
        %v2324 = vld [vmem:[%s2321 + $0x8] sm:$0xf]
        %v2325 = vld [vmem:[%s2321 + $0xc] sm:$0xf]
        %v2326 = vld [vmem:[%s2321 + $0x10] sm:$0xf]
        %v2327 = vld [vmem:[%s2321 + $0x14] sm:$0xf]
        %v2328 = vld [vmem:[%s2321 + $0x18] sm:$0xf]
        %v2329 = vld [vmem:[%s2321 + $0x1c] sm:$0xf]
        %v2330 = vld [vmem:[%s2321 + $0x20] sm:$0xf]
        %v2331 = vld [vmem:[%s2321 + $0x24] sm:$0xf]
        %v2332 = vld [vmem:[%s2321 + $0x28] sm:$0xf]
        %v2333 = vld [vmem:[%s2321 + $0x2c] sm:$0xf]
        %v2334 = vld [vmem:[%s2321 + $0x30] sm:$0xf]
        %v2335 = vld [vmem:[%s2321 + $0x34] sm:$0xf]
        %v2336 = vld [vmem:[%s2321 + $0x38] sm:$0xf]
        %v2337 = vld [vmem:[%s2321 + $0x3c] sm:$0xf]
        %v2338 = vrot.slane %v1458, 4
        %v2356 = vunpack.c.l.b16 %v2322
        %v2357 = vunpack.c.l.b16 %v2323
        %v2358 = vunpack.c.l.b16 %v2324
        %v2359 = vunpack.c.l.b16 %v2325
        %v2360 = vunpack.c.l.b16 %v2326
        %v2361 = vunpack.c.l.b16 %v2327
        %v2362 = vunpack.c.l.b16 %v2328
        %v2363 = vunpack.c.l.b16 %v2329
        %v2364 = vunpack.c.l.b16 %v2330
        %v2365 = vunpack.c.l.b16 %v2331
        %v2366 = vunpack.c.l.b16 %v2332
        %v2367 = vunpack.c.l.b16 %v2333
        %v2368 = vunpack.c.l.b16 %v2334
        %v2369 = vunpack.c.l.b16 %v2335
        %v2370 = vunpack.c.l.b16 %v2336
        %v2371 = vunpack.c.l.b16 %v2337
        %v2372 = vpack.c.b16 %v2357, %v2356
        %v2373 = vpack.c.b16 %v2359, %v2358
        %v2374 = vpack.c.b16 %v2361, %v2360
        %v2375 = vpack.c.b16 %v2363, %v2362
        %v2376 = vpack.c.b16 %v2365, %v2364
        %v2377 = vpack.c.b16 %v2367, %v2366
        %v2378 = vpack.c.b16 %v2369, %v2368
        %v2379 = vpack.c.b16 %v2371, %v2370
        %2388 = vmatprep.subr.bf16.mxu0 0
        %2389 = vmatpush1.bf16.msra.mxu0 %v2379
        %2390 = vmatprep.subr.bf16.mxu0 0
        %2391 = vmatpush1.bf16.msra.mxu0 %v2378
        %2392 = vmatprep.subr.bf16.mxu0 0
        %2393 = vmatpush1.bf16.msra.mxu0 %v2377
        %2394 = vmatprep.subr.bf16.mxu0 0
        %2395 = vmatpush1.bf16.msra.mxu0 %v2376
        %2396 = vmatprep.subr.bf16.mxu0 0
        %2397 = vmatpush1.bf16.msra.mxu0 %v2375
        %2398 = vmatprep.subr.bf16.mxu0 0
        %2399 = vmatpush1.bf16.msra.mxu0 %v2374
        %2400 = vmatprep.subr.bf16.mxu0 0
        %2401 = vmatpush1.bf16.msra.mxu0 %v2373
        %2402 = vmatprep.subr.bf16.mxu0 0
        %2403 = vmatpush1.bf16.msra.mxu0 %v2372
        %2404 = vmatprep.subr.bf16.mxu0 0
        %2405 = vmatpush2.bf16.msra.mxu0 0
        %2406 = vmatprep.subr.bf16.mxu0 0
        %2407 = vmatpush2.bf16.msra.mxu0 0
        %2408 = vmatprep.subr.bf16.mxu0 0
        %2409 = vmatpush2.bf16.msra.mxu0 0
        %2410 = vmatprep.subr.bf16.mxu0 0
        %2411 = vmatpush2.bf16.msra.mxu0 0
        %2412 = vmatprep.subr.bf16.mxu0 0
        %2413 = vmatpush2.bf16.msra.mxu0 0
        %2414 = vmatprep.subr.bf16.mxu0 0
        %2415 = vmatpush2.bf16.msra.mxu0 0
        %2416 = vmatprep.subr.bf16.mxu0 0
        %2417 = vmatpush2.bf16.msra.mxu0 0
        %2418 = vmatprep.subr.bf16.mxu0 0
        %2419 = vmatpush2.bf16.msra.mxu0 0
        %2420 = vmatprep.mubr.bf16.mxu0 0
        %2421 = vmatmul.mubr.bf16.gmra.mxu0 %v2338
        %v2422 = vpop.f32.mrf.mxu0
        %v2423 = vadd.f32 0.0, %v2422
        %v2424 = vpop.f32.mrf.mxu0
        %v2425 = vpop.f32.mrf.mxu0
        %v2426 = vpop.f32.mrf.mxu0
        %2427 = vdwg.mxu0
        %v2428 = vadd.f32 %v2320, %v2423
        %v2429 = vld [vmem:[%s6] sm:$0x1]
        %v2430 = vadd.f32 %v2428, %v2429
        %2431 = vst [vmem:[%s300] sm:$0x1] %v2430
        %s2432 = sand.u32 %s183, 1
        %s2433 = scalar_lea.sflag [#allocation8], %s2432
        %s2434 = sand.u32 %s183, 1
        %s2435 = scalar_lea.vmem [#allocation11], %s2434
        // Predicated region
        $region57: #{_lambda_.1} parent=47 // pred_check
          %p2436 = pneg %p193
        $region58: #{_lambda_.1} parent=47 // pred_check_branch
          %2438 = sbr.rel (%p2436) target = $region60
        $region59: #{_lambda_.1} parent=47 // pred_region
          %s2440 = ssub.s32 16, 16
          %2441 = vsyncadd %s2433, %s2440
          %s2442 = smul.addr %s23, 16
          %s2443 = scalar_lea.hbm %s7, %s2442
          %s2445 = sshll.u32 %s2435, 4
          %s2446 = int_to_ptr.vmem [resolvable:$true] %s2445
          %2448 = dma.vmem_to_hbm [thread:$0]  %s2446, 16, %s2443, %s2433
        $region60: #{_lambda_.1} parent=47 // pred_fallthru
          _
      $region48: #{_lambda_.1} parent=5 // pred_fallthru
        _
      %p2449 = scmp.le.s32.totalorder 2, %s18
      // Predicated region
      $region61: #{_lambda_.1} parent=5 // pred_check
        %p2450 = pneg %p2449
      $region62: #{_lambda_.1} parent=5 // pred_check_branch
        %2452 = sbr.rel (%p2450) target = $region64
      $region63: #{_lambda_.1} parent=5 // pred_region
        %s2453 = ssub.s32 %s18, 2
        // Predicated region
        $region65: #{_lambda_.1} parent=63 // pred_check
          %p2454 = pneg %p199
        $region66: #{_lambda_.1} parent=63 // pred_check_branch
          %2456 = sbr.rel (%p2454) target = $region68
        $region67: #{_lambda_.1} parent=63 // pred_region
          %s2457 = sand.u32 %s184, 1
          %s2458 = scalar_lea.sflag [#allocation8], %s2457
          %s2459 = sand.u32 %s184, 1
          %s2460 = scalar_lea.vmem [#allocation11], %s2459
          %2461 = dma.done %s2458, 16
        $region68: #{_lambda_.1} parent=63 // pred_fallthru
          _
      $region64: #{_lambda_.1} parent=5 // pred_fallthru
        _
    $region6: #{_lambda_.1} parent=1 // loop_footer
      %s22 = sadd.s32 1, %s18
    $region7: #{_lambda_.1} parent=1 // loop_footer_branch
      %17 = sbr.rel target = $region3
    $region8: #{_lambda_.1} parent=1 // loop_exit
      _
    %2462 = vsyncpa [#allocation7], 1
    %s2463 = scalar_lea.sflag [#allocation7], 1
    %2464 = vsyncpa %s2463, 1
    %2465 = vsyncpa [#allocation10], 1
    %2466 = vsyncpa [#allocation8], 1
    %s2467 = scalar_lea.sflag [#allocation8], 1
    %2468 = vsyncpa %s2467, 1

</llo_original>
